<compile_context>
chip_gen: v7x
topology: tpu7x:2x2x1
jax: 0.10.0
libtpu: 0.0.40
codegen_flags: <defaults>
</compile_context>

<pallas_src>
import functools

import jax
import jax.numpy as jnp
from jax.experimental import pallas as pl
from jax.experimental.pallas import tpu as pltpu

# ----------------------------------------------------------------------------
# Synthetic, deterministic config (cfg.* in the original repo)
# ----------------------------------------------------------------------------
STRIDES = (8, 16, 32)
SCALE_FACTOR = 2.0
SCALE_FACTOR_A = 2.0        # defined in __init__, unused in forward
NUM_CLASS = 4
WARMUP_EPOCHS = 5           # unused in forward
EPOCHS = 100                # unused in forward
DELTA = 0.1
DELTA_CONF = 0.05
VARTHETA = 0.5
BETA1 = 1.0
BETA2 = 1.0
ZETA = 0.7                  # unused in forward

IMG_SIZE = 128
BATCH = 2
REGION_SIZE = 7
TOPK_CANDIDATES = 15

LANE = 128
TILE_ROWS = 8               # rows per grid step (multiple of 8; sweep 8..64)

# 14 loss terms + 2 mask sums (N, N2) -> 16 used lanes of the output slab
N_TERMS = 14  # [fg1,bg1,iou1,s1,r1,l1,fg2,bg2,pos2,neg2,iou2,s2,r2,l2]
N_LANES = N_TERMS + 2

# Channel offsets inside the packed (C_PACK, rows, 128) input slab.
C_P1_CONF = 0
C_P1D_S = 1
C_P1D_R = 5
C_P1D_L = 6
C_P2_CONF = 10
C_P2_CLS = 11
C_P2D_S = C_P2_CLS + NUM_CLASS
C_P2D_R = C_P2D_S + 4
C_P2D_L = C_P2D_R + 1
C_LAB_L = C_P2D_L + 4
C_LAB_A = C_LAB_L + 4
C_LAB_R = C_LAB_A + 4
C_OBJ = C_LAB_R + 1
C_MIX = C_OBJ + 1
C_AREA = C_MIX + 1
C_CLS = C_AREA + 1
C_MATCH = C_CLS + NUM_CLASS
C_INV_STRIDE = C_MATCH + 1
C_INV_IMG2 = C_INV_STRIDE + 1
C_PACK = C_INV_IMG2 + 1     # 43 for NUM_CLASS=4


# ----------------------------------------------------------------------------
# Math helpers (usable both inside the kernel and in JAX glue)
# ----------------------------------------------------------------------------
def _smooth_l1_from_abs(n, beta=1.0):
    # SmoothL1 on a pre-computed |x - y| (nn.SmoothL1Loss default beta=1.0)
    return jnp.where(n < beta, (0.5 / beta) * n * n, n - 0.5 * beta)


def _smooth_l1(x, y, beta=1.0):
    return _smooth_l1_from_abs(jnp.abs(x - y), beta)


def _bce_logits(x, t):
    # BCEWithLogitsLoss(reduction='none'), numerically stable form
    return jnp.maximum(x, 0.0) - x * t + jnp.log(1.0 + jnp.exp(-jnp.abs(x)))


def _focal(x, t):
    # FocalLoss(gamma=2, alpha=1, reduction='none') from the module
    d = jnp.abs(t - jax.nn.sigmoid(x))
    return _bce_logits(x, t) * d * d  # gamma == 2, alpha == 1


def _giou_l(b1, b2, ch, recip=None):
    # GIOU on (l, t, r, b) point-offset boxes (utils_basic.GIOU_l_torch is not
    # provided; this is the standard ltrb GIOU with a small eps for stability).
    if recip is None:
        recip = lambda v: 1.0 / v
    w1 = ch(b1, 0) + ch(b1, 2)
    h1 = ch(b1, 1) + ch(b1, 3)
    w2 = ch(b2, 0) + ch(b2, 2)
    h2 = ch(b2, 1) + ch(b2, 3)
    area1 = w1 * h1
    area2 = w2 * h2
    inter_w = jnp.minimum(ch(b1, 0), ch(b2, 0)) + jnp.minimum(ch(b1, 2), ch(b2, 2))
    inter_h = jnp.minimum(ch(b1, 1), ch(b2, 1)) + jnp.minimum(ch(b1, 3), ch(b2, 3))
    inter = inter_w * inter_h
    union = area1 + area2 - inter
    iou = inter * recip(union + 1e-16)
    enc_w = jnp.maximum(ch(b1, 0), ch(b2, 0)) + jnp.maximum(ch(b1, 2), ch(b2, 2))
    enc_h = jnp.maximum(ch(b1, 1), ch(b2, 1)) + jnp.maximum(ch(b1, 3), ch(b2, 3))
    enc = enc_w * enc_h
    return iou - (enc - union) * recip(enc + 1e-16)


# ----------------------------------------------------------------------------
# The fused Pallas kernel: all dense per-cell loss terms for all 3 scales.
# Per grid step it consumes a (C_PACK, TILE_ROWS, 128) input block and emits a
# lane-dense (TILE_ROWS, 128) block: lane j (< N_LANES) holds term j summed
# over channels and lanes for that row; lanes >= N_LANES are zero.
# ----------------------------------------------------------------------------
def _loss_kernel(x_ref, out_ref, *, num_class):
    f32 = jnp.float32
    R = x_ref.shape[1]
    L = x_ref.shape[2]
    ch = lambda a, i: a[i:i + 1]                      # channel slicer
    recip = lambda v: pl.reciprocal(v, approx=True)   # EUP slot, not VALU

    lane = jax.lax.broadcasted_iota(jnp.int32, (R, L), 1)
    acc = {"o": jnp.zeros((R, L), f32)}

    def store(i, t):
        # channel sum (if needed) + cross-lane sum (XLU, otherwise-idle slot),
        # then scatter the per-row scalar into lane slot i of the output slab.
        if t.shape[0] > 1:
            t = jnp.sum(t, axis=0, keepdims=True)
        rs = jnp.sum(t[0], axis=-1, keepdims=True)    # (R, 1)
        acc["o"] = acc["o"] + jnp.where(lane == i, rs, 0.0)

    # ---- per-row reciprocal maps, packed as channels (no in-kernel iota) ----
    inv_stride = x_ref[C_INV_STRIDE:C_INV_STRIDE + 1]
    inv_img2 = x_ref[C_INV_IMG2:C_INV_IMG2 + 1]

    # ---- shared label-derived quantities (live across both heads) ----------
    label_l = x_ref[C_LAB_L:C_LAB_L + 4]
    label_a = x_ref[C_LAB_A:C_LAB_A + 4]
    label_r = x_ref[C_LAB_R:C_LAB_R + 1]
    obj_flag = x_ref[C_OBJ:C_OBJ + 1]
    label_mix = x_ref[C_MIX:C_MIX + 1]
    area_raw = x_ref[C_AREA:C_AREA + 1]
    label_cls = x_ref[C_CLS:C_CLS + num_class]

    obj_mask = (obj_flag == 1.0).astype(f32)
    noobj_mask = 1.0 - (obj_flag != 0.0).astype(f32)
    fuzzy_mask = 1.0 - obj_mask - noobj_mask
    gh = jnp.max(label_cls, axis=0, keepdims=True)

    bbox_loss_scale = SCALE_FACTOR - (SCALE_FACTOR - 1.0) * (
        (label_l[1:2] + label_l[3:4]) * (label_l[0:1] + label_l[2:3]) * inv_img2)
    area_weight = area_raw + (area_raw == 0.0).astype(f32)
    weight_r = SCALE_FACTOR - (SCALE_FACTOR - 1.0) * label_r
    # hoisted shared weights (each reused by several loss terms)
    w_geo = obj_mask * area_weight * label_mix * weight_r
    w_geo_l = w_geo * bbox_loss_scale
    w_cls = obj_mask * label_mix * area_weight

    # ---------------- head 1 (retired before touching head-2 channels) ------
    p1_d_l = x_ref[C_P1D_L:C_P1D_L + 4]
    giou1 = _giou_l(p1_d_l, label_l, ch, recip)
    scores_iou1 = bbox_loss_scale * (1.0 - giou1)
    scores_obb1 = jnp.sum(_smooth_l1(x_ref[C_P1D_S:C_P1D_S + 4], label_a),
                          axis=0, keepdims=True)
    scores_area1 = _smooth_l1(x_ref[C_P1D_R:C_P1D_R + 1], label_r)
    scores_loc1 = jnp.exp(-(scores_iou1 + scores_obb1 + scores_area1))
    offset01 = scores_loc1          # max over trailing singleton channel

    mix1 = VARTHETA * (fuzzy_mask * gh) + (1.0 - VARTHETA) * offset01
    bg_mask1 = noobj_mask + fuzzy_mask * (mix1 < 0.3).astype(f32) * (1.0 - fuzzy_mask * mix1)
    fg_mask1 = obj_mask * (VARTHETA * (obj_mask * gh) + (1.0 - VARTHETA) * offset01)

    label_conf_smooth = obj_mask * (1.0 - DELTA_CONF) + DELTA_CONF * 0.5
    focal1 = _focal(x_ref[C_P1_CONF:C_P1_CONF + 1], label_conf_smooth) * label_mix
    store(0, fg_mask1 * focal1)                                    # loss_fg1
    store(1, bg_mask1 * focal1)                                    # loss_bg1
    store(2, scores_iou1 * w_geo)                                  # loss_iou1
    store(3, scores_obb1 * w_geo)                                  # loss_s1
    store(4, scores_area1 * w_geo)                                 # loss_r1
    # SmoothL1(x/stride, y/stride) == smooth_l1(|x-y| * (1/stride))  (beta=1)
    store(5, _smooth_l1_from_abs(jnp.abs(p1_d_l - label_l) * inv_stride) * w_geo_l)

    # ---------------- head 2 -------------------------------------------------
    p2_d_l = x_ref[C_P2D_L:C_P2D_L + 4]
    giou2 = _giou_l(p2_d_l, label_l, ch, recip)
    scores_iou2 = bbox_loss_scale * (1.0 - giou2)
    scores_obb2 = jnp.sum(_smooth_l1(x_ref[C_P2D_S:C_P2D_S + 4], label_a),
                          axis=0, keepdims=True)
    scores_area2 = _smooth_l1(x_ref[C_P2D_R:C_P2D_R + 1], label_r)
    scores_loc2 = jnp.exp(-(scores_iou2 + scores_obb2 + scores_area2))

    cls_nz = (label_cls != 0.0).astype(f32)
    p2_cls = x_ref[C_P2_CLS:C_P2_CLS + num_class]
    cls_score = jnp.max(cls_nz * jax.nn.sigmoid(p2_cls), axis=0, keepdims=True)
    offset03 = jnp.sqrt(cls_score * scores_loc2)

    match_nz = (x_ref[C_MATCH:C_MATCH + 1] != 0.0).astype(f32)
    obj_match = obj_mask * match_nz
    # obj_mask is binary, so obj*(0.3*gh_obj + obj*0.7*obj*match*off)
    #                    == obj*(0.3*gh + 0.7*match*off)
    fg_mask2 = obj_mask * (0.3 * gh + 0.7 * match_nz * offset03)
    bg_mask2 = noobj_mask + fuzzy_mask * (offset03 < 0.3).astype(f32) * (1.0 - fuzzy_mask * offset03)

    focal2 = _focal(x_ref[C_P2_CONF:C_P2_CONF + 1], scores_loc2) * label_mix
    store(6, fg_mask2 * focal2)                                    # loss_fg2
    store(7, bg_mask2 * focal2)                                    # loss_bg2

    label_cls_smooth = cls_nz * (1.0 - DELTA) + DELTA / num_class
    bce_cls = _bce_logits(p2_cls, label_cls_smooth) * w_cls
    store(8, cls_nz * bce_cls)                                     # loss_pos2
    store(9, (1.0 - cls_nz) * bce_cls)                             # loss_neg2
    # loss_cls2 is NOT stored: it equals loss_pos2 + loss_neg2 (epilogue).
    store(10, scores_iou2 * w_geo)                                 # loss_iou2
    store(11, scores_obb2 * w_geo)                                 # loss_s2
    store(12, scores_area2 * w_geo)                                # loss_r2
    store(13, _smooth_l1_from_abs(jnp.abs(p2_d_l - label_l) * inv_stride) * w_geo_l)
    store(14, obj_mask)                                            # for N
    store(15, obj_match)                                           # for N2

    out_ref[...] = acc["o"]


# ----------------------------------------------------------------------------
# Host-side packing: one lane-dense channel-major slab for all 3 scales.
# ----------------------------------------------------------------------------
def _pack_scale(p1, p1_d, p2, p2_d, label, matching, stride):
    b, g = p1.shape[0], p1.shape[1]
    img = float(stride * g)
    inv_s = jnp.full((b, g, g, 1), 1.0 / float(stride), jnp.float32)
    inv_i2 = jnp.full((b, g, g, 1), 1.0 / (img * img), jnp.float32)
    # f32 pack preserves reference numerics; bf16 would halve v5e HBM traffic.
    feats = jnp.concatenate([
        p1[..., 9:10],                      # conf
        p1_d[..., 4:13],                    # s(4), r(1), l(4)
        p2[..., 9:10 + NUM_CLASS],          # conf + cls
        p2_d[..., 4:13],                    # s(4), r(1), l(4)
        label[..., 4:16 + NUM_CLASS],       # l, a, r, obj, mix, area, cls
        matching,
        inv_s,
        inv_i2,
    ], axis=-1).astype(jnp.float32)          # (B, G, G, C_PACK)
    s = g * g
    rpb = -(-s // LANE)                      # rows per batch
    feats = feats.reshape(b, s, C_PACK)
    feats = jnp.pad(feats, ((0, 0), (0, rpb * LANE - s), (0, 0)))
    return feats.reshape(b * rpb, LANE, C_PACK), rpb


def _pack_inputs(p1s, p1ds, p2s, p2ds, labels, matchings):
    blocks, group_ranges = [], []
    row = 0
    for k in range(len(p1s)):
        b = p1s[k].shape[0]
        blk, rpb = _pack_scale(p1s[k], p1ds[k], p2s[k], p2ds[k],
                               labels[k], matchings[k], int(STRIDES[k]))
        blocks.append(blk)
        for bi in range(b):
            group_ranges.append((row + bi * rpb, row + (bi + 1) * rpb))
        row += b * rpb
    x = jnp.concatenate(blocks, axis=0)        # (R_total, 128, C_PACK)
    r_pad = -(-row // TILE_ROWS) * TILE_ROWS
    if r_pad != row:
        x = jnp.pad(x, ((0, r_pad - row), (0, 0), (0, 0)))
    x = jnp.transpose(x, (2, 0, 1))            # single transpose -> (C, R, 128)
    return x, tuple(group_ranges), r_pad


def _run_loss_kernel(x, r_pad):
    n_tiles = r_pad // TILE_ROWS
    kernel = functools.partial(_loss_kernel, num_class=NUM_CLASS)
    return pl.pallas_call(
        kernel,
        out_shape=jax.ShapeDtypeStruct((r_pad, LANE), jnp.float32),
        grid=(n_tiles,),
        in_specs=[pl.BlockSpec((C_PACK, TILE_ROWS, LANE), lambda r: (0, r, 0))],
        out_specs=pl.BlockSpec((TILE_ROWS, LANE), lambda r: (r, 0)),
        compiler_params=pltpu.CompilerParams(
            dimension_semantics=("parallel",)),   # rows independent -> megacore
    )(x)


# ----------------------------------------------------------------------------
# JAX glue: scores_loc2 (NHWC) and the dynamic-k label assignment
# ----------------------------------------------------------------------------
def _scores_loc2_nhwc(p2_d, label, stride, grid_size):
    chl = lambda a, i: a[..., i:i + 1]
    label_l = label[..., 4:8]
    label_a = label[..., 8:12]
    label_r = label[..., 12:13]
    img_size = float(stride * grid_size)
    bbox_loss_scale = SCALE_FACTOR - (SCALE_FACTOR - 1.0) * (
        (label_l[..., 1:2] + label_l[..., 3:4]) * (label_l[..., 0:1] + label_l[..., 2:3])
        / (img_size * img_size))
    p2_d_s = p2_d[..., 4:8]
    p2_d_r = p2_d[..., 8:9]
    p2_d_l = p2_d[..., 9:13]
    giou2 = _giou_l(p2_d_l, label_l, chl)
    scores_iou2 = bbox_loss_scale * (1.0 - giou2)
    scores_obb2 = jnp.sum(_smooth_l1(p2_d_s, label_a), axis=-1, keepdims=True)
    scores_area2 = _smooth_l1(p2_d_r, label_r)
    return jnp.exp(-(scores_iou2 + scores_obb2 + scores_area2))


def _unfold_nhwc(x, k):
    # equivalent of Loss.unfold: (B, G, G, C) -> (B, G, G, k*k, C)
    b, g = x.shape[0], x.shape[1]
    pad = k // 2
    xp = jnp.pad(x, ((0, 0), (pad, pad), (pad, pad), (0, 0)))
    patches = [xp[:, dy:dy + g, dx:dx + g, :]
               for dy in range(k) for dx in range(k)]
    return jnp.stack(patches, axis=3)


def _dynamic_matching(label, p2, scores_loc2):
    # TODO(synk): the original resolves scatter collisions by sequential
    # overwrite (last write wins) inside a data-dependent Python loop with
    # dynamic-k topk; here it is vectorised with scatter-max, which only
    # differs when two source cells assign the same neighbour position.
    b, g = label.shape[0], label.shape[1]
    k = REGION_SIZE
    pad = k // 2
    f32 = jnp.float32

    label_xywh = label[..., :4]
    label_cls = label[..., 16:]
    obj_mask = (label[..., 13:14] == 1.0).astype(f32)
    gh = jnp.max(label_cls, axis=-1, keepdims=True)
    gh_obj = obj_mask * gh
    p2_cls = p2[..., 10:]

    xywh_region = _unfold_nhwc(label_xywh, k)
    other_obj_mask = jnp.sum(xywh_region - label_xywh[:, :, :, None, :],
                             axis=-1, keepdims=True)
    other_obj_mask = (other_obj_mask == 0.0).astype(f32)
    topk_mask = other_obj_mask * (gh_obj == 1.0).astype(f32)[:, :, :, None, :]

    scores_loc_matrix = (_unfold_nhwc(obj_mask * scores_loc2, k) * topk_mask)[..., 0]
    topk_1 = jax.lax.top_k(scores_loc_matrix, TOPK_CANDIDATES)[0]
    dynamic_ks = jnp.maximum(jnp.sum(topk_1, axis=-1).astype(jnp.int32), 1)

    cls_score = jnp.max((label_cls != 0.0).astype(f32) * jax.nn.sigmoid(p2_cls),
                        axis=-1, keepdims=True)
    cost = jnp.sqrt(obj_mask * cls_score * scores_loc2)
    cost_matrix = (_unfold_nhwc(cost, k) * topk_mask)[..., 0]  # (B, G, G, k*k)

    center = (k * k - 1) // 2
    center_nz = cost_matrix[..., center] != 0.0

    top_vals, top_idx = jax.lax.top_k(cost_matrix, TOPK_CANDIDATES)
    rank = jnp.arange(TOPK_CANDIDATES)
    keep = ((rank[None, None, None, :] < dynamic_ks[..., None])
            & center_nz[..., None]
            & (top_vals > 0.0))
    vals = jnp.where(keep, top_vals, 0.0)

    ys = jnp.arange(g)[None, :, None, None]
    xs = jnp.arange(g)[None, None, :, None]
    y_pos = jnp.clip(ys + top_idx // k - pad, 0, g - 1)
    x_pos = jnp.clip(xs + top_idx % k - pad, 0, g - 1)
    b_idx = jnp.broadcast_to(jnp.arange(b)[:, None, None, None], top_idx.shape)

    matching = jnp.zeros((b, g, g), f32)
    matching = matching.at[b_idx.reshape(-1),
                           y_pos.reshape(-1),
                           x_pos.reshape(-1)].max(vals.reshape(-1))
    return matching[..., None]  # (B, G, G, 1)


# ----------------------------------------------------------------------------
# Epilogue: per-(scale, batch) normalisation + combination (mirrors the
# original's torch.sum(loss / N) / batch_size per scale, summed over scales).
# Operates on the tiny (r_pad, 128) lane-reduced kernel output.
# ----------------------------------------------------------------------------
def _finish(out, group_ranges, batch_size):
    per_row = jnp.transpose(out[:, :N_LANES])                  # (16, r_pad)
    gs = jnp.stack([jnp.sum(per_row[:, r0:r1], axis=1)
                    for (r0, r1) in group_ranges], axis=1)     # (16, n_groups)
    n1 = jnp.maximum(gs[N_TERMS] + 1e-16, 1.0)
    n2 = jnp.maximum(gs[N_TERMS + 1] + 1e-16, 1.0)
    use_n2 = jnp.asarray([i in (6, 7) for i in range(N_TERMS)])   # fg2, bg2
    denom = jnp.where(use_n2[:, None], n2[None, :], n1[None, :])
    t = jnp.sum(gs[:N_TERMS] / denom, axis=1) / batch_size     # (N_TERMS,)

    (loss_fg1, loss_bg1, loss_iou1, loss_s1, loss_r1, loss_l1,
     loss_fg2, loss_bg2, loss_pos2, loss_neg2, loss_iou2,
     loss_s2, loss_r2, loss_l2) = [t[i] for i in range(N_TERMS)]

    loss_cls2 = loss_pos2 + loss_neg2   # exact identity with the reference

    loss_r1 = 16.0 * loss_r1
    loss_l1 = 0.2 * loss_l1
    loss_r2 = 16.0 * loss_r2
    loss_l2 = 0.2 * loss_l2

    loss_fg = (loss_fg1 + loss_fg2) * 2.0
    loss_bg = (loss_bg1 + loss_bg2) * 2.0
    loss_pos = loss_pos2 * 5.0
    loss_neg = loss_neg2 * 2.0
    loss_cls = loss_cls2
    loss_iou = BETA1 * loss_iou1 + BETA2 * loss_iou2
    loss_s = BETA1 * loss_s1 + BETA2 * loss_s2
    loss_r = BETA1 * loss_r1 + BETA2 * loss_r2
    loss_l = BETA1 * loss_l1 + BETA2 * loss_l2
    loss = (loss_fg + loss_bg + loss_iou + loss_s + loss_r
            + loss_pos + loss_neg + loss_l)
    return (loss, loss_fg, loss_bg, loss_pos, loss_neg,
            loss_iou, loss_cls, loss_s, loss_r, loss_l)


# ----------------------------------------------------------------------------
# Top-level forward (mirrors Loss.forward)
# ----------------------------------------------------------------------------
def _loss_forward_impl(p1, p1_d, p2, p2_d, label_sbbox, label_mbbox,
                       label_lbbox, epoch, i):
    labels = (label_sbbox, label_mbbox, label_lbbox)
    matchings = []
    for k in range(3):
        g = p1[k].shape[1]
        sl2 = _scores_loc2_nhwc(p2_d[k], labels[k], int(STRIDES[k]), g)
        matchings.append(_dynamic_matching(labels[k], p2[k], sl2))

    x, group_ranges, r_pad = _pack_inputs(p1, p1_d, p2, p2_d, labels, matchings)
    out = _run_loss_kernel(x, r_pad)
    return _finish(out, group_ranges, p1[0].shape[0])


loss_forward = jax.jit(_loss_forward_impl)


# ----------------------------------------------------------------------------
# Deterministic synthetic inputs + run
# ----------------------------------------------------------------------------
def _make_label(key, g):
    k1, k2, k3, k4, k5, k6, k7 = jax.random.split(key, 7)
    img = float(IMG_SIZE)
    xywh = jax.random.uniform(k1, (BATCH, g, g, 4), jnp.float32) * img
    lbox = jax.random.uniform(k2, (BATCH, g, g, 4), jnp.float32) * (0.25 * img)
    a = jax.random.uniform(k3, (BATCH, g, g, 4), jnp.float32)
    r = jax.random.uniform(k4, (BATCH, g, g, 1), jnp.float32)
    u = jax.random.uniform(k5, (BATCH, g, g, 1), jnp.float32)
    obj_flag = jnp.where(u > 0.8, 1.0, jnp.where(u > 0.6, 0.5, 0.0))
    mix = jnp.ones((BATCH, g, g, 1), jnp.float32)
    area = jnp.round(jax.random.uniform(k6, (BATCH, g, g, 1), jnp.float32) * 2.0) / 2.0
    cls_id = jax.random.randint(k7, (BATCH, g, g), 0, NUM_CLASS)
    cls = (jax.nn.one_hot(cls_id, NUM_CLASS, dtype=jnp.float32)
           * (obj_flag != 0.0).astype(jnp.float32))
    return jnp.concatenate([xywh, lbox, a, r, obj_flag, mix, area, cls], axis=-1)


def _make_pd(key, g):
    a = jax.random.uniform(key, (BATCH, g, g, 13), jnp.float32)
    l = a[..., 9:13] * (0.25 * float(IMG_SIZE))
    return jnp.concatenate([a[..., :9], l], axis=-1)


if __name__ == "__main__":
    key = jax.random.PRNGKey(0)
    cp = 10 + NUM_CLASS
    grids = [IMG_SIZE // s for s in STRIDES]

    p1_list, p1_d_list, p2_list, p2_d_list, label_list = [], [], [], [], []
    for g in grids:
        key, k1, k2, k3, k4, k5 = jax.random.split(key, 6)
        p1_list.append(jax.random.normal(k1, (BATCH, g, g, cp), jnp.float32))
        p2_list.append(jax.random.normal(k2, (BATCH, g, g, cp), jnp.float32))
        p1_d_list.append(_make_pd(k3, g))
        p2_d_list.append(_make_pd(k4, g))
        label_list.append(_make_label(k5, g))

    out = loss_forward(tuple(p1_list), tuple(p1_d_list),
                       tuple(p2_list), tuple(p2_d_list),
                       label_list[0], label_list[1], label_list[2],
                       10, 0)
    out = jax.block_until_ready(out)
    assert len(out) == 10
    assert all(bool(jnp.isfinite(v)) for v in out)
    print("KERNEL_OK")
</pallas_src>

<mosaic_0001>
module attributes {stable_mosaic.version = 11 : i64} {
  func.func private @main(%arg0: i32) attributes {dimension_semantics = [#tpu.dimension_semantics<core_parallel>], iteration_bounds = array<i64: 2>, tpu.core_type = #tpu.core_type<sc_scalar_subcore>, window_params = []} {
    return
  }
}

module attributes {stable_mosaic.version = 11 : i64} {
  func.func private @main(%arg0: i32) attributes {dimension_semantics = [#tpu.dimension_semantics<core_parallel>], iteration_bounds = array<i64: 2>, tpu.core_type = #tpu.core_type<sc_scalar_subcore>, window_params = []} {
    return
  }
}

module attributes {stable_mosaic.version = 11 : i64} {
  func.func @_loss_kernel(%arg0: i32, %arg1: memref<43x8x128xf32, #tpu.memory_space<vmem>>, %arg2: memref<8x128xf32, #tpu.memory_space<vmem>>) attributes {dimension_semantics = [#tpu.dimension_semantics<parallel>], iteration_bounds = array<i64: 1>, scalar_prefetch = 0 : i64, scratch_operands = 0 : i64, tpu.core_type = #tpu.core_type<tc>, window_params = [{transform_indices = @transform_0, window_bounds = array<i64: 43, 8, 128>}, {transform_indices = @transform_1, window_bounds = array<i64: 8, 128>}]} {
    %0 = tpu.iota {dimensions = array<i32: 1>} : vector<8x128xi32>
    %cst = arith.constant 0.000000e+00 : f32
    %1 = vector.broadcast %cst : f32 to vector<8x128xf32>
    %c41 = arith.constant 41 : index
    %c0 = arith.constant 0 : index
    %c0_0 = arith.constant 0 : index
    %2 = vector.load %arg1[%c41, %c0, %c0_0] : memref<43x8x128xf32, #tpu.memory_space<vmem>>, vector<1x8x128xf32>
    %c42 = arith.constant 42 : index
    %c0_1 = arith.constant 0 : index
    %c0_2 = arith.constant 0 : index
    %3 = vector.load %arg1[%c42, %c0_1, %c0_2] : memref<43x8x128xf32, #tpu.memory_space<vmem>>, vector<1x8x128xf32>
    %c24 = arith.constant 24 : index
    %c0_3 = arith.constant 0 : index
    %c0_4 = arith.constant 0 : index
    %4 = vector.load %arg1[%c24, %c0_3, %c0_4] : memref<43x8x128xf32, #tpu.memory_space<vmem>>, vector<4x8x128xf32>
    %c28 = arith.constant 28 : index
    %c0_5 = arith.constant 0 : index
    %c0_6 = arith.constant 0 : index
    %5 = vector.load %arg1[%c28, %c0_5, %c0_6] : memref<43x8x128xf32, #tpu.memory_space<vmem>>, vector<4x8x128xf32>
    %c32 = arith.constant 32 : index
    %c0_7 = arith.constant 0 : index
    %c0_8 = arith.constant 0 : index
    %6 = vector.load %arg1[%c32, %c0_7, %c0_8] : memref<43x8x128xf32, #tpu.memory_space<vmem>>, vector<1x8x128xf32>
    %c33 = arith.constant 33 : index
    %c0_9 = arith.constant 0 : index
    %c0_10 = arith.constant 0 : index
    %7 = vector.load %arg1[%c33, %c0_9, %c0_10] : memref<43x8x128xf32, #tpu.memory_space<vmem>>, vector<1x8x128xf32>
    %c34 = arith.constant 34 : index
    %c0_11 = arith.constant 0 : index
    %c0_12 = arith.constant 0 : index
    %8 = vector.load %arg1[%c34, %c0_11, %c0_12] : memref<43x8x128xf32, #tpu.memory_space<vmem>>, vector<1x8x128xf32>
    %c35 = arith.constant 35 : index
    %c0_13 = arith.constant 0 : index
    %c0_14 = arith.constant 0 : index
    %9 = vector.load %arg1[%c35, %c0_13, %c0_14] : memref<43x8x128xf32, #tpu.memory_space<vmem>>, vector<1x8x128xf32>
    %c36 = arith.constant 36 : index
    %c0_15 = arith.constant 0 : index
    %c0_16 = arith.constant 0 : index
    %10 = vector.load %arg1[%c36, %c0_15, %c0_16] : memref<43x8x128xf32, #tpu.memory_space<vmem>>, vector<4x8x128xf32>
    %cst_17 = arith.constant 1.000000e+00 : f32
    %11 = vector.broadcast %cst_17 : f32 to vector<1x8x128xf32>
    %12 = arith.cmpf oeq, %7, %11 : vector<1x8x128xf32>
    %13 = arith.extui %12 : vector<1x8x128xi1> to vector<1x8x128xi32>
    %14 = arith.sitofp %13 : vector<1x8x128xi32> to vector<1x8x128xf32>
    %cst_18 = arith.constant 0.000000e+00 : f32
    %15 = vector.broadcast %cst_18 : f32 to vector<1x8x128xf32>
    %16 = arith.cmpf one, %7, %15 : vector<1x8x128xf32>
    %17 = arith.extui %16 : vector<1x8x128xi1> to vector<1x8x128xi32>
    %18 = arith.sitofp %17 : vector<1x8x128xi32> to vector<1x8x128xf32>
    %cst_19 = arith.constant 1.000000e+00 : f32
    %19 = vector.broadcast %cst_19 : f32 to vector<1x8x128xf32>
    %20 = arith.subf %19, %18 : vector<1x8x128xf32>
    %cst_20 = arith.constant 1.000000e+00 : f32
    %21 = vector.broadcast %cst_20 : f32 to vector<1x8x128xf32>
    %22 = arith.subf %21, %14 : vector<1x8x128xf32>
    %23 = arith.subf %22, %20 : vector<1x8x128xf32>
    %cst_21 = arith.constant dense<0xFF800000> : vector<8x128xf32>
    %24 = vector.multi_reduction <maximumf>, %10, %cst_21 [0] : vector<4x8x128xf32> to vector<8x128xf32>
    %25 = vector.shape_cast %24 : vector<8x128xf32> to vector<1x8x128xf32>
    %26 = vector.extract_strided_slice %4 {offsets = [1, 0, 0], sizes = [1, 8, 128], strides = [1, 1, 1]} : vector<4x8x128xf32> to vector<1x8x128xf32>
    %27 = vector.extract_strided_slice %4 {offsets = [3, 0, 0], sizes = [1, 8, 128], strides = [1, 1, 1]} : vector<4x8x128xf32> to vector<1x8x128xf32>
    %28 = arith.addf %26, %27 : vector<1x8x128xf32>
    %29 = vector.extract_strided_slice %4 {offsets = [0, 0, 0], sizes = [1, 8, 128], strides = [1, 1, 1]} : vector<4x8x128xf32> to vector<1x8x128xf32>
    %30 = vector.extract_strided_slice %4 {offsets = [2, 0, 0], sizes = [1, 8, 128], strides = [1, 1, 1]} : vector<4x8x128xf32> to vector<1x8x128xf32>
    %31 = arith.addf %29, %30 : vector<1x8x128xf32>
    %32 = arith.mulf %28, %31 : vector<1x8x128xf32>
    %33 = arith.mulf %32, %3 : vector<1x8x128xf32>
    %cst_22 = arith.constant 1.000000e+00 : f32
    %34 = vector.broadcast %cst_22 : f32 to vector<1x8x128xf32>
    %35 = arith.mulf %34, %33 : vector<1x8x128xf32>
    %cst_23 = arith.constant 2.000000e+00 : f32
    %36 = vector.broadcast %cst_23 : f32 to vector<1x8x128xf32>
    %37 = arith.subf %36, %35 : vector<1x8x128xf32>
    %cst_24 = arith.constant 0.000000e+00 : f32
    %38 = vector.broadcast %cst_24 : f32 to vector<1x8x128xf32>
    %39 = arith.cmpf oeq, %9, %38 : vector<1x8x128xf32>
    %40 = arith.extui %39 : vector<1x8x128xi1> to vector<1x8x128xi32>
    %41 = arith.sitofp %40 : vector<1x8x128xi32> to vector<1x8x128xf32>
    %42 = arith.addf %9, %41 : vector<1x8x128xf32>
    %cst_25 = arith.constant 1.000000e+00 : f32
    %43 = vector.broadcast %cst_25 : f32 to vector<1x8x128xf32>
    %44 = arith.mulf %43, %6 : vector<1x8x128xf32>
    %cst_26 = arith.constant 2.000000e+00 : f32
    %45 = vector.broadcast %cst_26 : f32 to vector<1x8x128xf32>
    %46 = arith.subf %45, %44 : vector<1x8x128xf32>
    %47 = arith.mulf %14, %42 : vector<1x8x128xf32>
    %48 = arith.mulf %47, %8 : vector<1x8x128xf32>
    %49 = arith.mulf %48, %46 : vector<1x8x128xf32>
    %50 = arith.mulf %49, %37 : vector<1x8x128xf32>
    %51 = arith.mulf %14, %8 : vector<1x8x128xf32>
    %52 = arith.mulf %51, %42 : vector<1x8x128xf32>
    %c6 = arith.constant 6 : index
    %c0_27 = arith.constant 0 : index
    %c0_28 = arith.constant 0 : index
    %53 = vector.load %arg1[%c6, %c0_27, %c0_28] : memref<43x8x128xf32, #tpu.memory_space<vmem>>, vector<4x8x128xf32>
    %54 = vector.extract_strided_slice %53 {offsets = [0, 0, 0], sizes = [1, 8, 128], strides = [1, 1, 1]} : vector<4x8x128xf32> to vector<1x8x128xf32>
    %55 = vector.extract_strided_slice %53 {offsets = [2, 0, 0], sizes = [1, 8, 128], strides = [1, 1, 1]} : vector<4x8x128xf32> to vector<1x8x128xf32>
    %56 = arith.addf %54, %55 : vector<1x8x128xf32>
    %57 = vector.extract_strided_slice %53 {offsets = [1, 0, 0], sizes = [1, 8, 128], strides = [1, 1, 1]} : vector<4x8x128xf32> to vector<1x8x128xf32>
    %58 = vector.extract_strided_slice %53 {offsets = [3, 0, 0], sizes = [1, 8, 128], strides = [1, 1, 1]} : vector<4x8x128xf32> to vector<1x8x128xf32>
    %59 = arith.addf %57, %58 : vector<1x8x128xf32>
    %60 = vector.extract_strided_slice %4 {offsets = [0, 0, 0], sizes = [1, 8, 128], strides = [1, 1, 1]} : vector<4x8x128xf32> to vector<1x8x128xf32>
    %61 = vector.extract_strided_slice %4 {offsets = [2, 0, 0], sizes = [1, 8, 128], strides = [1, 1, 1]} : vector<4x8x128xf32> to vector<1x8x128xf32>
    %62 = arith.addf %60, %61 : vector<1x8x128xf32>
    %63 = vector.extract_strided_slice %4 {offsets = [1, 0, 0], sizes = [1, 8, 128], strides = [1, 1, 1]} : vector<4x8x128xf32> to vector<1x8x128xf32>
    %64 = vector.extract_strided_slice %4 {offsets = [3, 0, 0], sizes = [1, 8, 128], strides = [1, 1, 1]} : vector<4x8x128xf32> to vector<1x8x128xf32>
    %65 = arith.addf %63, %64 : vector<1x8x128xf32>
    %66 = arith.mulf %56, %59 : vector<1x8x128xf32>
    %67 = arith.mulf %62, %65 : vector<1x8x128xf32>
    %68 = vector.extract_strided_slice %53 {offsets = [0, 0, 0], sizes = [1, 8, 128], strides = [1, 1, 1]} : vector<4x8x128xf32> to vector<1x8x128xf32>
    %69 = vector.extract_strided_slice %4 {offsets = [0, 0, 0], sizes = [1, 8, 128], strides = [1, 1, 1]} : vector<4x8x128xf32> to vector<1x8x128xf32>
    %70 = arith.minimumf %68, %69 : vector<1x8x128xf32>
    %71 = vector.extract_strided_slice %53 {offsets = [2, 0, 0], sizes = [1, 8, 128], strides = [1, 1, 1]} : vector<4x8x128xf32> to vector<1x8x128xf32>
    %72 = vector.extract_strided_slice %4 {offsets = [2, 0, 0], sizes = [1, 8, 128], strides = [1, 1, 1]} : vector<4x8x128xf32> to vector<1x8x128xf32>
    %73 = arith.minimumf %71, %72 : vector<1x8x128xf32>
    %74 = arith.addf %70, %73 : vector<1x8x128xf32>
    %75 = vector.extract_strided_slice %53 {offsets = [1, 0, 0], sizes = [1, 8, 128], strides = [1, 1, 1]} : vector<4x8x128xf32> to vector<1x8x128xf32>
    %76 = vector.extract_strided_slice %4 {offsets = [1, 0, 0], sizes = [1, 8, 128], strides = [1, 1, 1]} : vector<4x8x128xf32> to vector<1x8x128xf32>
    %77 = arith.minimumf %75, %76 : vector<1x8x128xf32>
    %78 = vector.extract_strided_slice %53 {offsets = [3, 0, 0], sizes = [1, 8, 128], strides = [1, 1, 1]} : vector<4x8x128xf32> to vector<1x8x128xf32>
    %79 = vector.extract_strided_slice %4 {offsets = [3, 0, 0], sizes = [1, 8, 128], strides = [1, 1, 1]} : vector<4x8x128xf32> to vector<1x8x128xf32>
    %80 = arith.minimumf %78, %79 : vector<1x8x128xf32>
    %81 = arith.addf %77, %80 : vector<1x8x128xf32>
    %82 = arith.mulf %74, %81 : vector<1x8x128xf32>
    %83 = arith.addf %66, %67 : vector<1x8x128xf32>
    %84 = arith.subf %83, %82 : vector<1x8x128xf32>
    %cst_29 = arith.constant 1.000000e-16 : f32
    %85 = vector.broadcast %cst_29 : f32 to vector<1x8x128xf32>
    %86 = arith.addf %84, %85 : vector<1x8x128xf32>
    %87 = tpu.reciprocal %86 {approx = true} : vector<1x8x128xf32> -> vector<1x8x128xf32>
    %88 = arith.mulf %82, %87 : vector<1x8x128xf32>
    %89 = vector.extract_strided_slice %53 {offsets = [0, 0, 0], sizes = [1, 8, 128], strides = [1, 1, 1]} : vector<4x8x128xf32> to vector<1x8x128xf32>
    %90 = vector.extract_strided_slice %4 {offsets = [0, 0, 0], sizes = [1, 8, 128], strides = [1, 1, 1]} : vector<4x8x128xf32> to vector<1x8x128xf32>
    %91 = arith.maximumf %89, %90 : vector<1x8x128xf32>
    %92 = vector.extract_strided_slice %53 {offsets = [2, 0, 0], sizes = [1, 8, 128], strides = [1, 1, 1]} : vector<4x8x128xf32> to vector<1x8x128xf32>
    %93 = vector.extract_strided_slice %4 {offsets = [2, 0, 0], sizes = [1, 8, 128], strides = [1, 1, 1]} : vector<4x8x128xf32> to vector<1x8x128xf32>
    %94 = arith.maximumf %92, %93 : vector<1x8x128xf32>
    %95 = arith.addf %91, %94 : vector<1x8x128xf32>
    %96 = vector.extract_strided_slice %53 {offsets = [1, 0, 0], sizes = [1, 8, 128], strides = [1, 1, 1]} : vector<4x8x128xf32> to vector<1x8x128xf32>
    %97 = vector.extract_strided_slice %4 {offsets = [1, 0, 0], sizes = [1, 8, 128], strides = [1, 1, 1]} : vector<4x8x128xf32> to vector<1x8x128xf32>
    %98 = arith.maximumf %96, %97 : vector<1x8x128xf32>
    %99 = vector.extract_strided_slice %53 {offsets = [3, 0, 0], sizes = [1, 8, 128], strides = [1, 1, 1]} : vector<4x8x128xf32> to vector<1x8x128xf32>
    %100 = vector.extract_strided_slice %4 {offsets = [3, 0, 0], sizes = [1, 8, 128], strides = [1, 1, 1]} : vector<4x8x128xf32> to vector<1x8x128xf32>
    %101 = arith.maximumf %99, %100 : vector<1x8x128xf32>
    %102 = arith.addf %98, %101 : vector<1x8x128xf32>
    %103 = arith.mulf %95, %102 : vector<1x8x128xf32>
    %104 = arith.subf %103, %84 : vector<1x8x128xf32>
    %cst_30 = arith.constant 1.000000e-16 : f32
    %105 = vector.broadcast %cst_30 : f32 to vector<1x8x128xf32>
    %106 = arith.addf %103, %105 : vector<1x8x128xf32>
    %107 = tpu.reciprocal %106 {approx = true} : vector<1x8x128xf32> -> vector<1x8x128xf32>
    %108 = arith.mulf %104, %107 : vector<1x8x128xf32>
    %109 = arith.subf %88, %108 : vector<1x8x128xf32>
    %cst_31 = arith.constant 1.000000e+00 : f32
    %110 = vector.broadcast %cst_31 : f32 to vector<1x8x128xf32>
    %111 = arith.subf %110, %109 : vector<1x8x128xf32>
    %112 = arith.mulf %37, %111 : vector<1x8x128xf32>
    %c1 = arith.constant 1 : index
    %c0_32 = arith.constant 0 : index
    %c0_33 = arith.constant 0 : index
    %113 = vector.load %arg1[%c1, %c0_32, %c0_33] : memref<43x8x128xf32, #tpu.memory_space<vmem>>, vector<4x8x128xf32>
    %114 = arith.subf %113, %5 : vector<4x8x128xf32>
    %115 = math.absf %114 : vector<4x8x128xf32>
    %cst_34 = arith.constant 1.000000e+00 : f32
    %116 = vector.broadcast %cst_34 : f32 to vector<4x8x128xf32>
    %117 = arith.cmpf olt, %115, %116 : vector<4x8x128xf32>
    %cst_35 = arith.constant 5.000000e-01 : f32
    %118 = vector.broadcast %cst_35 : f32 to vector<4x8x128xf32>
    %119 = arith.mulf %118, %115 : vector<4x8x128xf32>
    %120 = arith.mulf %119, %115 : vector<4x8x128xf32>
    %cst_36 = arith.constant 5.000000e-01 : f32
    %121 = vector.broadcast %cst_36 : f32 to vector<4x8x128xf32>
    %122 = arith.subf %115, %121 : vector<4x8x128xf32>
    %123 = arith.select %117, %120, %122 : vector<4x8x128xi1>, vector<4x8x128xf32>
    %cst_37 = arith.constant dense<0.000000e+00> : vector<8x128xf32>
    %124 = vector.multi_reduction <add>, %123, %cst_37 [0] : vector<4x8x128xf32> to vector<8x128xf32>
    %125 = vector.shape_cast %124 : vector<8x128xf32> to vector<1x8x128xf32>
    %c5 = arith.constant 5 : index
    %c0_38 = arith.constant 0 : index
    %c0_39 = arith.constant 0 : index
    %126 = vector.load %arg1[%c5, %c0_38, %c0_39] : memref<43x8x128xf32, #tpu.memory_space<vmem>>, vector<1x8x128xf32>
    %127 = arith.subf %126, %6 : vector<1x8x128xf32>
    %128 = math.absf %127 : vector<1x8x128xf32>
    %cst_40 = arith.constant 1.000000e+00 : f32
    %129 = vector.broadcast %cst_40 : f32 to vector<1x8x128xf32>
    %130 = arith.cmpf olt, %128, %129 : vector<1x8x128xf32>
    %cst_41 = arith.constant 5.000000e-01 : f32
    %131 = vector.broadcast %cst_41 : f32 to vector<1x8x128xf32>
    %132 = arith.mulf %131, %128 : vector<1x8x128xf32>
    %133 = arith.mulf %132, %128 : vector<1x8x128xf32>
    %cst_42 = arith.constant 5.000000e-01 : f32
    %134 = vector.broadcast %cst_42 : f32 to vector<1x8x128xf32>
    %135 = arith.subf %128, %134 : vector<1x8x128xf32>
    %136 = arith.select %130, %133, %135 : vector<1x8x128xi1>, vector<1x8x128xf32>
    %137 = arith.addf %112, %125 : vector<1x8x128xf32>
    %138 = arith.addf %137, %136 : vector<1x8x128xf32>
    %cst_43 = arith.constant 0.000000e+00 : f32
    %139 = vector.broadcast %cst_43 : f32 to vector<1x8x128xf32>
    %140 = arith.subf %139, %138 : vector<1x8x128xf32>
    %141 = math.exp %140 : vector<1x8x128xf32>
    %142 = arith.mulf %23, %25 : vector<1x8x128xf32>
    %cst_44 = arith.constant 5.000000e-01 : f32
    %143 = vector.broadcast %cst_44 : f32 to vector<1x8x128xf32>
    %144 = arith.mulf %143, %142 : vector<1x8x128xf32>
    %cst_45 = arith.constant 5.000000e-01 : f32
    %145 = vector.broadcast %cst_45 : f32 to vector<1x8x128xf32>
    %146 = arith.mulf %145, %141 : vector<1x8x128xf32>
    %147 = arith.addf %144, %146 : vector<1x8x128xf32>
    %cst_46 = arith.constant 3.000000e-01 : f32
    %148 = vector.broadcast %cst_46 : f32 to vector<1x8x128xf32>
    %149 = arith.cmpf olt, %147, %148 : vector<1x8x128xf32>
    %150 = arith.extui %149 : vector<1x8x128xi1> to vector<1x8x128xi32>
    %151 = arith.sitofp %150 : vector<1x8x128xi32> to vector<1x8x128xf32>
    %152 = arith.mulf %23, %151 : vector<1x8x128xf32>
    %153 = arith.mulf %23, %147 : vector<1x8x128xf32>
    %cst_47 = arith.constant 1.000000e+00 : f32
    %154 = vector.broadcast %cst_47 : f32 to vector<1x8x128xf32>
    %155 = arith.subf %154, %153 : vector<1x8x128xf32>
    %156 = arith.mulf %152, %155 : vector<1x8x128xf32>
    %157 = arith.addf %20, %156 : vector<1x8x128xf32>
    %158 = arith.mulf %14, %25 : vector<1x8x128xf32>
    %cst_48 = arith.constant 5.000000e-01 : f32
    %159 = vector.broadcast %cst_48 : f32 to vector<1x8x128xf32>
    %160 = arith.mulf %159, %158 : vector<1x8x128xf32>
    %cst_49 = arith.constant 5.000000e-01 : f32
    %161 = vector.broadcast %cst_49 : f32 to vector<1x8x128xf32>
    %162 = arith.mulf %161, %141 : vector<1x8x128xf32>
    %163 = arith.addf %160, %162 : vector<1x8x128xf32>
    %164 = arith.mulf %14, %163 : vector<1x8x128xf32>
    %cst_50 = arith.constant 0.949999988 : f32
    %165 = vector.broadcast %cst_50 : f32 to vector<1x8x128xf32>
    %166 = arith.mulf %14, %165 : vector<1x8x128xf32>
    %cst_51 = arith.constant 2.500000e-02 : f32
    %167 = vector.broadcast %cst_51 : f32 to vector<1x8x128xf32>
    %168 = arith.addf %166, %167 : vector<1x8x128xf32>
    %c0_52 = arith.constant 0 : index
    %c0_53 = arith.constant 0 : index
    %c0_54 = arith.constant 0 : index
    %169 = vector.load %arg1[%c0_52, %c0_53, %c0_54] : memref<43x8x128xf32, #tpu.memory_space<vmem>>, vector<1x8x128xf32>
    %170 = arith.negf %169 : vector<1x8x128xf32>
    %171 = math.exp %170 : vector<1x8x128xf32>
    %cst_55 = arith.constant 1.000000e+00 : f32
    %172 = vector.broadcast %cst_55 : f32 to vector<1x8x128xf32>
    %173 = arith.addf %172, %171 : vector<1x8x128xf32>
    %174 = arith.divf %172, %173 : vector<1x8x128xf32>
    %175 = arith.subf %168, %174 : vector<1x8x128xf32>
    %176 = math.absf %175 : vector<1x8x128xf32>
    %cst_56 = arith.constant 0.000000e+00 : f32
    %177 = vector.broadcast %cst_56 : f32 to vector<1x8x128xf32>
    %178 = arith.maximumf %169, %177 : vector<1x8x128xf32>
    %179 = arith.mulf %169, %168 : vector<1x8x128xf32>
    %180 = arith.subf %178, %179 : vector<1x8x128xf32>
    %181 = math.absf %169 : vector<1x8x128xf32>
    %cst_57 = arith.constant 0.000000e+00 : f32
    %182 = vector.broadcast %cst_57 : f32 to vector<1x8x128xf32>
    %183 = arith.subf %182, %181 : vector<1x8x128xf32>
    %184 = math.exp %183 : vector<1x8x128xf32>
    %cst_58 = arith.constant 1.000000e+00 : f32
    %185 = vector.broadcast %cst_58 : f32 to vector<1x8x128xf32>
    %186 = arith.addf %185, %184 : vector<1x8x128xf32>
    %187 = math.log %186 : vector<1x8x128xf32>
    %188 = arith.addf %180, %187 : vector<1x8x128xf32>
    %189 = arith.mulf %188, %176 : vector<1x8x128xf32>
    %190 = arith.mulf %189, %176 : vector<1x8x128xf32>
    %191 = arith.mulf %190, %8 : vector<1x8x128xf32>
    %192 = arith.mulf %164, %191 : vector<1x8x128xf32>
    %193 = vector.shape_cast %192 : vector<1x8x128xf32> to vector<8x128xf32>
    %cst_59 = arith.constant dense<0.000000e+00> : vector<8xf32>
    %194 = vector.multi_reduction <add>, %193, %cst_59 [1] : vector<8x128xf32> to vector<8xf32>
    %195 = vector.shape_cast %194 : vector<8xf32> to vector<8x1xf32>
    %c0_i32 = arith.constant 0 : i32
    %196 = vector.broadcast %c0_i32 : i32 to vector<8x128xi32>
    %197 = arith.cmpi eq, %0, %196 : vector<8x128xi32>
    %cst_60 = arith.constant 0.000000e+00 : f32
    %198 = vector.shape_cast %195 : vector<8x1xf32> to vector<8x1xf32>
    %199 = vector.broadcast %198 : vector<8x1xf32> to vector<8x128xf32>
    %200 = vector.broadcast %cst_60 : f32 to vector<8x128xf32>
    %201 = arith.select %197, %199, %200 : vector<8x128xi1>, vector<8x128xf32>
    %202 = arith.addf %1, %201 : vector<8x128xf32>
    %203 = arith.mulf %157, %191 : vector<1x8x128xf32>
    %204 = vector.shape_cast %203 : vector<1x8x128xf32> to vector<8x128xf32>
    %cst_61 = arith.constant dense<0.000000e+00> : vector<8xf32>
    %205 = vector.multi_reduction <add>, %204, %cst_61 [1] : vector<8x128xf32> to vector<8xf32>
    %206 = vector.shape_cast %205 : vector<8xf32> to vector<8x1xf32>
    %c1_i32 = arith.constant 1 : i32
    %207 = vector.broadcast %c1_i32 : i32 to vector<8x128xi32>
    %208 = arith.cmpi eq, %0, %207 : vector<8x128xi32>
    %cst_62 = arith.constant 0.000000e+00 : f32
    %209 = vector.shape_cast %206 : vector<8x1xf32> to vector<8x1xf32>
    %210 = vector.broadcast %209 : vector<8x1xf32> to vector<8x128xf32>
    %211 = vector.broadcast %cst_62 : f32 to vector<8x128xf32>
    %212 = arith.select %208, %210, %211 : vector<8x128xi1>, vector<8x128xf32>
    %213 = arith.addf %202, %212 : vector<8x128xf32>
    %214 = arith.mulf %112, %49 : vector<1x8x128xf32>
    %215 = vector.shape_cast %214 : vector<1x8x128xf32> to vector<8x128xf32>
    %cst_63 = arith.constant dense<0.000000e+00> : vector<8xf32>
    %216 = vector.multi_reduction <add>, %215, %cst_63 [1] : vector<8x128xf32> to vector<8xf32>
    %217 = vector.shape_cast %216 : vector<8xf32> to vector<8x1xf32>
    %c2_i32 = arith.constant 2 : i32
    %218 = vector.broadcast %c2_i32 : i32 to vector<8x128xi32>
    %219 = arith.cmpi eq, %0, %218 : vector<8x128xi32>
    %cst_64 = arith.constant 0.000000e+00 : f32
    %220 = vector.shape_cast %217 : vector<8x1xf32> to vector<8x1xf32>
    %221 = vector.broadcast %220 : vector<8x1xf32> to vector<8x128xf32>
    %222 = vector.broadcast %cst_64 : f32 to vector<8x128xf32>
    %223 = arith.select %219, %221, %222 : vector<8x128xi1>, vector<8x128xf32>
    %224 = arith.addf %213, %223 : vector<8x128xf32>
    %225 = arith.mulf %125, %49 : vector<1x8x128xf32>
    %226 = vector.shape_cast %225 : vector<1x8x128xf32> to vector<8x128xf32>
    %cst_65 = arith.constant dense<0.000000e+00> : vector<8xf32>
    %227 = vector.multi_reduction <add>, %226, %cst_65 [1] : vector<8x128xf32> to vector<8xf32>
    %228 = vector.shape_cast %227 : vector<8xf32> to vector<8x1xf32>
    %c3_i32 = arith.constant 3 : i32
    %229 = vector.broadcast %c3_i32 : i32 to vector<8x128xi32>
    %230 = arith.cmpi eq, %0, %229 : vector<8x128xi32>
    %cst_66 = arith.constant 0.000000e+00 : f32
    %231 = vector.shape_cast %228 : vector<8x1xf32> to vector<8x1xf32>
    %232 = vector.broadcast %231 : vector<8x1xf32> to vector<8x128xf32>
    %233 = vector.broadcast %cst_66 : f32 to vector<8x128xf32>
    %234 = arith.select %230, %232, %233 : vector<8x128xi1>, vector<8x128xf32>
    %235 = arith.addf %224, %234 : vector<8x128xf32>
    %236 = arith.mulf %136, %49 : vector<1x8x128xf32>
    %237 = vector.shape_cast %236 : vector<1x8x128xf32> to vector<8x128xf32>
    %cst_67 = arith.constant dense<0.000000e+00> : vector<8xf32>
    %238 = vector.multi_reduction <add>, %237, %cst_67 [1] : vector<8x128xf32> to vector<8xf32>
    %239 = vector.shape_cast %238 : vector<8xf32> to vector<8x1xf32>
    %c4_i32 = arith.constant 4 : i32
    %240 = vector.broadcast %c4_i32 : i32 to vector<8x128xi32>
    %241 = arith.cmpi eq, %0, %240 : vector<8x128xi32>
    %cst_68 = arith.constant 0.000000e+00 : f32
    %242 = vector.shape_cast %239 : vector<8x1xf32> to vector<8x1xf32>
    %243 = vector.broadcast %242 : vector<8x1xf32> to vector<8x128xf32>
    %244 = vector.broadcast %cst_68 : f32 to vector<8x128xf32>
    %245 = arith.select %241, %243, %244 : vector<8x128xi1>, vector<8x128xf32>
    %246 = arith.addf %235, %245 : vector<8x128xf32>
    %247 = arith.subf %53, %4 : vector<4x8x128xf32>
    %248 = math.absf %247 : vector<4x8x128xf32>
    %249 = vector.broadcast %2 : vector<1x8x128xf32> to vector<4x8x128xf32>
    %250 = arith.mulf %248, %249 : vector<4x8x128xf32>
    %cst_69 = arith.constant 1.000000e+00 : f32
    %251 = vector.broadcast %cst_69 : f32 to vector<4x8x128xf32>
    %252 = arith.cmpf olt, %250, %251 : vector<4x8x128xf32>
    %cst_70 = arith.constant 5.000000e-01 : f32
    %253 = vector.broadcast %cst_70 : f32 to vector<4x8x128xf32>
    %254 = arith.mulf %253, %250 : vector<4x8x128xf32>
    %255 = arith.mulf %254, %250 : vector<4x8x128xf32>
    %cst_71 = arith.constant 5.000000e-01 : f32
    %256 = vector.broadcast %cst_71 : f32 to vector<4x8x128xf32>
    %257 = arith.subf %250, %256 : vector<4x8x128xf32>
    %258 = arith.select %252, %255, %257 : vector<4x8x128xi1>, vector<4x8x128xf32>
    %259 = vector.broadcast %50 : vector<1x8x128xf32> to vector<4x8x128xf32>
    %260 = arith.mulf %258, %259 : vector<4x8x128xf32>
    %cst_72 = arith.constant dense<0.000000e+00> : vector<8x128xf32>
    %261 = vector.multi_reduction <add>, %260, %cst_72 [0] : vector<4x8x128xf32> to vector<8x128xf32>
    %262 = vector.shape_cast %261 : vector<8x128xf32> to vector<1x8x128xf32>
    %263 = vector.shape_cast %262 : vector<1x8x128xf32> to vector<8x128xf32>
    %cst_73 = arith.constant dense<0.000000e+00> : vector<8xf32>
    %264 = vector.multi_reduction <add>, %263, %cst_73 [1] : vector<8x128xf32> to vector<8xf32>
    %265 = vector.shape_cast %264 : vector<8xf32> to vector<8x1xf32>
    %c5_i32 = arith.constant 5 : i32
    %266 = vector.broadcast %c5_i32 : i32 to vector<8x128xi32>
    %267 = arith.cmpi eq, %0, %266 : vector<8x128xi32>
    %cst_74 = arith.constant 0.000000e+00 : f32
    %268 = vector.shape_cast %265 : vector<8x1xf32> to vector<8x1xf32>
    %269 = vector.broadcast %268 : vector<8x1xf32> to vector<8x128xf32>
    %270 = vector.broadcast %cst_74 : f32 to vector<8x128xf32>
    %271 = arith.select %267, %269, %270 : vector<8x128xi1>, vector<8x128xf32>
    %272 = arith.addf %246, %271 : vector<8x128xf32>
    %c20 = arith.constant 20 : index
    %c0_75 = arith.constant 0 : index
    %c0_76 = arith.constant 0 : index
    %273 = vector.load %arg1[%c20, %c0_75, %c0_76] : memref<43x8x128xf32, #tpu.memory_space<vmem>>, vector<4x8x128xf32>
    %274 = vector.extract_strided_slice %273 {offsets = [0, 0, 0], sizes = [1, 8, 128], strides = [1, 1, 1]} : vector<4x8x128xf32> to vector<1x8x128xf32>
    %275 = vector.extract_strided_slice %273 {offsets = [2, 0, 0], sizes = [1, 8, 128], strides = [1, 1, 1]} : vector<4x8x128xf32> to vector<1x8x128xf32>
    %276 = arith.addf %274, %275 : vector<1x8x128xf32>
    %277 = vector.extract_strided_slice %273 {offsets = [1, 0, 0], sizes = [1, 8, 128], strides = [1, 1, 1]} : vector<4x8x128xf32> to vector<1x8x128xf32>
    %278 = vector.extract_strided_slice %273 {offsets = [3, 0, 0], sizes = [1, 8, 128], strides = [1, 1, 1]} : vector<4x8x128xf32> to vector<1x8x128xf32>
    %279 = arith.addf %277, %278 : vector<1x8x128xf32>
    %280 = vector.extract_strided_slice %4 {offsets = [0, 0, 0], sizes = [1, 8, 128], strides = [1, 1, 1]} : vector<4x8x128xf32> to vector<1x8x128xf32>
    %281 = vector.extract_strided_slice %4 {offsets = [2, 0, 0], sizes = [1, 8, 128], strides = [1, 1, 1]} : vector<4x8x128xf32> to vector<1x8x128xf32>
    %282 = arith.addf %280, %281 : vector<1x8x128xf32>
    %283 = vector.extract_strided_slice %4 {offsets = [1, 0, 0], sizes = [1, 8, 128], strides = [1, 1, 1]} : vector<4x8x128xf32> to vector<1x8x128xf32>
    %284 = vector.extract_strided_slice %4 {offsets = [3, 0, 0], sizes = [1, 8, 128], strides = [1, 1, 1]} : vector<4x8x128xf32> to vector<1x8x128xf32>
    %285 = arith.addf %283, %284 : vector<1x8x128xf32>
    %286 = arith.mulf %276, %279 : vector<1x8x128xf32>
    %287 = arith.mulf %282, %285 : vector<1x8x128xf32>
    %288 = vector.extract_strided_slice %273 {offsets = [0, 0, 0], sizes = [1, 8, 128], strides = [1, 1, 1]} : vector<4x8x128xf32> to vector<1x8x128xf32>
    %289 = vector.extract_strided_slice %4 {offsets = [0, 0, 0], sizes = [1, 8, 128], strides = [1, 1, 1]} : vector<4x8x128xf32> to vector<1x8x128xf32>
    %290 = arith.minimumf %288, %289 : vector<1x8x128xf32>
    %291 = vector.extract_strided_slice %273 {offsets = [2, 0, 0], sizes = [1, 8, 128], strides = [1, 1, 1]} : vector<4x8x128xf32> to vector<1x8x128xf32>
    %292 = vector.extract_strided_slice %4 {offsets = [2, 0, 0], sizes = [1, 8, 128], strides = [1, 1, 1]} : vector<4x8x128xf32> to vector<1x8x128xf32>
    %293 = arith.minimumf %291, %292 : vector<1x8x128xf32>
    %294 = arith.addf %290, %293 : vector<1x8x128xf32>
    %295 = vector.extract_strided_slice %273 {offsets = [1, 0, 0], sizes = [1, 8, 128], strides = [1, 1, 1]} : vector<4x8x128xf32> to vector<1x8x128xf32>
    %296 = vector.extract_strided_slice %4 {offsets = [1, 0, 0], sizes = [1, 8, 128], strides = [1, 1, 1]} : vector<4x8x128xf32> to vector<1x8x128xf32>
    %297 = arith.minimumf %295, %296 : vector<1x8x128xf32>
    %298 = vector.extract_strided_slice %273 {offsets = [3, 0, 0], sizes = [1, 8, 128], strides = [1, 1, 1]} : vector<4x8x128xf32> to vector<1x8x128xf32>
    %299 = vector.extract_strided_slice %4 {offsets = [3, 0, 0], sizes = [1, 8, 128], strides = [1, 1, 1]} : vector<4x8x128xf32> to vector<1x8x128xf32>
    %300 = arith.minimumf %298, %299 : vector<1x8x128xf32>
    %301 = arith.addf %297, %300 : vector<1x8x128xf32>
    %302 = arith.mulf %294, %301 : vector<1x8x128xf32>
    %303 = arith.addf %286, %287 : vector<1x8x128xf32>
    %304 = arith.subf %303, %302 : vector<1x8x128xf32>
    %cst_77 = arith.constant 1.000000e-16 : f32
    %305 = vector.broadcast %cst_77 : f32 to vector<1x8x128xf32>
    %306 = arith.addf %304, %305 : vector<1x8x128xf32>
    %307 = tpu.reciprocal %306 {approx = true} : vector<1x8x128xf32> -> vector<1x8x128xf32>
    %308 = arith.mulf %302, %307 : vector<1x8x128xf32>
    %309 = vector.extract_strided_slice %273 {offsets = [0, 0, 0], sizes = [1, 8, 128], strides = [1, 1, 1]} : vector<4x8x128xf32> to vector<1x8x128xf32>
    %310 = vector.extract_strided_slice %4 {offsets = [0, 0, 0], sizes = [1, 8, 128], strides = [1, 1, 1]} : vector<4x8x128xf32> to vector<1x8x128xf32>
    %311 = arith.maximumf %309, %310 : vector<1x8x128xf32>
    %312 = vector.extract_strided_slice %273 {offsets = [2, 0, 0], sizes = [1, 8, 128], strides = [1, 1, 1]} : vector<4x8x128xf32> to vector<1x8x128xf32>
    %313 = vector.extract_strided_slice %4 {offsets = [2, 0, 0], sizes = [1, 8, 128], strides = [1, 1, 1]} : vector<4x8x128xf32> to vector<1x8x128xf32>
    %314 = arith.maximumf %312, %313 : vector<1x8x128xf32>
    %315 = arith.addf %311, %314 : vector<1x8x128xf32>
    %316 = vector.extract_strided_slice %273 {offsets = [1, 0, 0], sizes = [1, 8, 128], strides = [1, 1, 1]} : vector<4x8x128xf32> to vector<1x8x128xf32>
    %317 = vector.extract_strided_slice %4 {offsets = [1, 0, 0], sizes = [1, 8, 128], strides = [1, 1, 1]} : vector<4x8x128xf32> to vector<1x8x128xf32>
    %318 = arith.maximumf %316, %317 : vector<1x8x128xf32>
    %319 = vector.extract_strided_slice %273 {offsets = [3, 0, 0], sizes = [1, 8, 128], strides = [1, 1, 1]} : vector<4x8x128xf32> to vector<1x8x128xf32>
    %320 = vector.extract_strided_slice %4 {offsets = [3, 0, 0], sizes = [1, 8, 128], strides = [1, 1, 1]} : vector<4x8x128xf32> to vector<1x8x128xf32>
    %321 = arith.maximumf %319, %320 : vector<1x8x128xf32>
    %322 = arith.addf %318, %321 : vector<1x8x128xf32>
    %323 = arith.mulf %315, %322 : vector<1x8x128xf32>
    %324 = arith.subf %323, %304 : vector<1x8x128xf32>
    %cst_78 = arith.constant 1.000000e-16 : f32
    %325 = vector.broadcast %cst_78 : f32 to vector<1x8x128xf32>
    %326 = arith.addf %323, %325 : vector<1x8x128xf32>
    %327 = tpu.reciprocal %326 {approx = true} : vector<1x8x128xf32> -> vector<1x8x128xf32>
    %328 = arith.mulf %324, %327 : vector<1x8x128xf32>
    %329 = arith.subf %308, %328 : vector<1x8x128xf32>
    %cst_79 = arith.constant 1.000000e+00 : f32
    %330 = vector.broadcast %cst_79 : f32 to vector<1x8x128xf32>
    %331 = arith.subf %330, %329 : vector<1x8x128xf32>
    %332 = arith.mulf %37, %331 : vector<1x8x128xf32>
    %c15 = arith.constant 15 : index
    %c0_80 = arith.constant 0 : index
    %c0_81 = arith.constant 0 : index
    %333 = vector.load %arg1[%c15, %c0_80, %c0_81] : memref<43x8x128xf32, #tpu.memory_space<vmem>>, vector<4x8x128xf32>
    %334 = arith.subf %333, %5 : vector<4x8x128xf32>
    %335 = math.absf %334 : vector<4x8x128xf32>
    %cst_82 = arith.constant 1.000000e+00 : f32
    %336 = vector.broadcast %cst_82 : f32 to vector<4x8x128xf32>
    %337 = arith.cmpf olt, %335, %336 : vector<4x8x128xf32>
    %cst_83 = arith.constant 5.000000e-01 : f32
    %338 = vector.broadcast %cst_83 : f32 to vector<4x8x128xf32>
    %339 = arith.mulf %338, %335 : vector<4x8x128xf32>
    %340 = arith.mulf %339, %335 : vector<4x8x128xf32>
    %cst_84 = arith.constant 5.000000e-01 : f32
    %341 = vector.broadcast %cst_84 : f32 to vector<4x8x128xf32>
    %342 = arith.subf %335, %341 : vector<4x8x128xf32>
    %343 = arith.select %337, %340, %342 : vector<4x8x128xi1>, vector<4x8x128xf32>
    %cst_85 = arith.constant dense<0.000000e+00> : vector<8x128xf32>
    %344 = vector.multi_reduction <add>, %343, %cst_85 [0] : vector<4x8x128xf32> to vector<8x128xf32>
    %345 = vector.shape_cast %344 : vector<8x128xf32> to vector<1x8x128xf32>
    %c19 = arith.constant 19 : index
    %c0_86 = arith.constant 0 : index
    %c0_87 = arith.constant 0 : index
    %346 = vector.load %arg1[%c19, %c0_86, %c0_87] : memref<43x8x128xf32, #tpu.memory_space<vmem>>, vector<1x8x128xf32>
    %347 = arith.subf %346, %6 : vector<1x8x128xf32>
    %348 = math.absf %347 : vector<1x8x128xf32>
    %cst_88 = arith.constant 1.000000e+00 : f32
    %349 = vector.broadcast %cst_88 : f32 to vector<1x8x128xf32>
    %350 = arith.cmpf olt, %348, %349 : vector<1x8x128xf32>
    %cst_89 = arith.constant 5.000000e-01 : f32
    %351 = vector.broadcast %cst_89 : f32 to vector<1x8x128xf32>
    %352 = arith.mulf %351, %348 : vector<1x8x128xf32>
    %353 = arith.mulf %352, %348 : vector<1x8x128xf32>
    %cst_90 = arith.constant 5.000000e-01 : f32
    %354 = vector.broadcast %cst_90 : f32 to vector<1x8x128xf32>
    %355 = arith.subf %348, %354 : vector<1x8x128xf32>
    %356 = arith.select %350, %353, %355 : vector<1x8x128xi1>, vector<1x8x128xf32>
    %357 = arith.addf %332, %345 : vector<1x8x128xf32>
    %358 = arith.addf %357, %356 : vector<1x8x128xf32>
    %cst_91 = arith.constant 0.000000e+00 : f32
    %359 = vector.broadcast %cst_91 : f32 to vector<1x8x128xf32>
    %360 = arith.subf %359, %358 : vector<1x8x128xf32>
    %361 = math.exp %360 : vector<1x8x128xf32>
    %cst_92 = arith.constant 0.000000e+00 : f32
    %362 = vector.broadcast %cst_92 : f32 to vector<4x8x128xf32>
    %363 = arith.cmpf one, %10, %362 : vector<4x8x128xf32>
    %364 = arith.extui %363 : vector<4x8x128xi1> to vector<4x8x128xi32>
    %365 = arith.sitofp %364 : vector<4x8x128xi32> to vector<4x8x128xf32>
    %c11 = arith.constant 11 : index
    %c0_93 = arith.constant 0 : index
    %c0_94 = arith.constant 0 : index
    %366 = vector.load %arg1[%c11, %c0_93, %c0_94] : memref<43x8x128xf32, #tpu.memory_space<vmem>>, vector<4x8x128xf32>
    %367 = arith.negf %366 : vector<4x8x128xf32>
    %368 = math.exp %367 : vector<4x8x128xf32>
    %cst_95 = arith.constant 1.000000e+00 : f32
    %369 = vector.broadcast %cst_95 : f32 to vector<4x8x128xf32>
    %370 = arith.addf %369, %368 : vector<4x8x128xf32>
    %371 = arith.divf %369, %370 : vector<4x8x128xf32>
    %372 = arith.mulf %365, %371 : vector<4x8x128xf32>
    %cst_96 = arith.constant dense<0xFF800000> : vector<8x128xf32>
    %373 = vector.multi_reduction <maximumf>, %372, %cst_96 [0] : vector<4x8x128xf32> to vector<8x128xf32>
    %374 = vector.shape_cast %373 : vector<8x128xf32> to vector<1x8x128xf32>
    %375 = arith.mulf %374, %361 : vector<1x8x128xf32>
    %376 = math.sqrt %375 : vector<1x8x128xf32>
    %c40 = arith.constant 40 : index
    %c0_97 = arith.constant 0 : index
    %c0_98 = arith.constant 0 : index
    %377 = vector.load %arg1[%c40, %c0_97, %c0_98] : memref<43x8x128xf32, #tpu.memory_space<vmem>>, vector<1x8x128xf32>
    %cst_99 = arith.constant 0.000000e+00 : f32
    %378 = vector.broadcast %cst_99 : f32 to vector<1x8x128xf32>
    %379 = arith.cmpf one, %377, %378 : vector<1x8x128xf32>
    %380 = arith.extui %379 : vector<1x8x128xi1> to vector<1x8x128xi32>
    %381 = arith.sitofp %380 : vector<1x8x128xi32> to vector<1x8x128xf32>
    %382 = arith.mulf %14, %381 : vector<1x8x128xf32>
    %cst_100 = arith.constant 3.000000e-01 : f32
    %383 = vector.broadcast %cst_100 : f32 to vector<1x8x128xf32>
    %384 = arith.mulf %383, %25 : vector<1x8x128xf32>
    %cst_101 = arith.constant 0.699999988 : f32
    %385 = vector.broadcast %cst_101 : f32 to vector<1x8x128xf32>
    %386 = arith.mulf %385, %381 : vector<1x8x128xf32>
    %387 = arith.mulf %386, %376 : vector<1x8x128xf32>
    %388 = arith.addf %384, %387 : vector<1x8x128xf32>
    %389 = arith.mulf %14, %388 : vector<1x8x128xf32>
    %cst_102 = arith.constant 3.000000e-01 : f32
    %390 = vector.broadcast %cst_102 : f32 to vector<1x8x128xf32>
    %391 = arith.cmpf olt, %376, %390 : vector<1x8x128xf32>
    %392 = arith.extui %391 : vector<1x8x128xi1> to vector<1x8x128xi32>
    %393 = arith.sitofp %392 : vector<1x8x128xi32> to vector<1x8x128xf32>
    %394 = arith.mulf %23, %393 : vector<1x8x128xf32>
    %395 = arith.mulf %23, %376 : vector<1x8x128xf32>
    %cst_103 = arith.constant 1.000000e+00 : f32
    %396 = vector.broadcast %cst_103 : f32 to vector<1x8x128xf32>
    %397 = arith.subf %396, %395 : vector<1x8x128xf32>
    %398 = arith.mulf %394, %397 : vector<1x8x128xf32>
    %399 = arith.addf %20, %398 : vector<1x8x128xf32>
    %c10 = arith.constant 10 : index
    %c0_104 = arith.constant 0 : index
    %c0_105 = arith.constant 0 : index
    %400 = vector.load %arg1[%c10, %c0_104, %c0_105] : memref<43x8x128xf32, #tpu.memory_space<vmem>>, vector<1x8x128xf32>
    %401 = arith.negf %400 : vector<1x8x128xf32>
    %402 = math.exp %401 : vector<1x8x128xf32>
    %cst_106 = arith.constant 1.000000e+00 : f32
    %403 = vector.broadcast %cst_106 : f32 to vector<1x8x128xf32>
    %404 = arith.addf %403, %402 : vector<1x8x128xf32>
    %405 = arith.divf %403, %404 : vector<1x8x128xf32>
    %406 = arith.subf %361, %405 : vector<1x8x128xf32>
    %407 = math.absf %406 : vector<1x8x128xf32>
    %cst_107 = arith.constant 0.000000e+00 : f32
    %408 = vector.broadcast %cst_107 : f32 to vector<1x8x128xf32>
    %409 = arith.maximumf %400, %408 : vector<1x8x128xf32>
    %410 = arith.mulf %400, %361 : vector<1x8x128xf32>
    %411 = arith.subf %409, %410 : vector<1x8x128xf32>
    %412 = math.absf %400 : vector<1x8x128xf32>
    %cst_108 = arith.constant 0.000000e+00 : f32
    %413 = vector.broadcast %cst_108 : f32 to vector<1x8x128xf32>
    %414 = arith.subf %413, %412 : vector<1x8x128xf32>
    %415 = math.exp %414 : vector<1x8x128xf32>
    %cst_109 = arith.constant 1.000000e+00 : f32
    %416 = vector.broadcast %cst_109 : f32 to vector<1x8x128xf32>
    %417 = arith.addf %416, %415 : vector<1x8x128xf32>
    %418 = math.log %417 : vector<1x8x128xf32>
    %419 = arith.addf %411, %418 : vector<1x8x128xf32>
    %420 = arith.mulf %419, %407 : vector<1x8x128xf32>
    %421 = arith.mulf %420, %407 : vector<1x8x128xf32>
    %422 = arith.mulf %421, %8 : vector<1x8x128xf32>
    %423 = arith.mulf %389, %422 : vector<1x8x128xf32>
    %424 = vector.shape_cast %423 : vector<1x8x128xf32> to vector<8x128xf32>
    %cst_110 = arith.constant dense<0.000000e+00> : vector<8xf32>
    %425 = vector.multi_reduction <add>, %424, %cst_110 [1] : vector<8x128xf32> to vector<8xf32>
    %426 = vector.shape_cast %425 : vector<8xf32> to vector<8x1xf32>
    %c6_i32 = arith.constant 6 : i32
    %427 = vector.broadcast %c6_i32 : i32 to vector<8x128xi32>
    %428 = arith.cmpi eq, %0, %427 : vector<8x128xi32>
    %cst_111 = arith.constant 0.000000e+00 : f32
    %429 = vector.shape_cast %426 : vector<8x1xf32> to vector<8x1xf32>
    %430 = vector.broadcast %429 : vector<8x1xf32> to vector<8x128xf32>
    %431 = vector.broadcast %cst_111 : f32 to vector<8x128xf32>
    %432 = arith.select %428, %430, %431 : vector<8x128xi1>, vector<8x128xf32>
    %433 = arith.addf %272, %432 : vector<8x128xf32>
    %434 = arith.mulf %399, %422 : vector<1x8x128xf32>
    %435 = vector.shape_cast %434 : vector<1x8x128xf32> to vector<8x128xf32>
    %cst_112 = arith.constant dense<0.000000e+00> : vector<8xf32>
    %436 = vector.multi_reduction <add>, %435, %cst_112 [1] : vector<8x128xf32> to vector<8xf32>
    %437 = vector.shape_cast %436 : vector<8xf32> to vector<8x1xf32>
    %c7_i32 = arith.constant 7 : i32
    %438 = vector.broadcast %c7_i32 : i32 to vector<8x128xi32>
    %439 = arith.cmpi eq, %0, %438 : vector<8x128xi32>
    %cst_113 = arith.constant 0.000000e+00 : f32
    %440 = vector.shape_cast %437 : vector<8x1xf32> to vector<8x1xf32>
    %441 = vector.broadcast %440 : vector<8x1xf32> to vector<8x128xf32>
    %442 = vector.broadcast %cst_113 : f32 to vector<8x128xf32>
    %443 = arith.select %439, %441, %442 : vector<8x128xi1>, vector<8x128xf32>
    %444 = arith.addf %433, %443 : vector<8x128xf32>
    %cst_114 = arith.constant 0.899999976 : f32
    %445 = vector.broadcast %cst_114 : f32 to vector<4x8x128xf32>
    %446 = arith.mulf %365, %445 : vector<4x8x128xf32>
    %cst_115 = arith.constant 2.500000e-02 : f32
    %447 = vector.broadcast %cst_115 : f32 to vector<4x8x128xf32>
    %448 = arith.addf %446, %447 : vector<4x8x128xf32>
    %cst_116 = arith.constant 0.000000e+00 : f32
    %449 = vector.broadcast %cst_116 : f32 to vector<4x8x128xf32>
    %450 = arith.maximumf %366, %449 : vector<4x8x128xf32>
    %451 = arith.mulf %366, %448 : vector<4x8x128xf32>
    %452 = arith.subf %450, %451 : vector<4x8x128xf32>
    %453 = math.absf %366 : vector<4x8x128xf32>
    %cst_117 = arith.constant 0.000000e+00 : f32
    %454 = vector.broadcast %cst_117 : f32 to vector<4x8x128xf32>
    %455 = arith.subf %454, %453 : vector<4x8x128xf32>
    %456 = math.exp %455 : vector<4x8x128xf32>
    %cst_118 = arith.constant 1.000000e+00 : f32
    %457 = vector.broadcast %cst_118 : f32 to vector<4x8x128xf32>
    %458 = arith.addf %457, %456 : vector<4x8x128xf32>
    %459 = math.log %458 : vector<4x8x128xf32>
    %460 = arith.addf %452, %459 : vector<4x8x128xf32>
    %461 = vector.broadcast %52 : vector<1x8x128xf32> to vector<4x8x128xf32>
    %462 = arith.mulf %460, %461 : vector<4x8x128xf32>
    %463 = arith.mulf %365, %462 : vector<4x8x128xf32>
    %cst_119 = arith.constant dense<0.000000e+00> : vector<8x128xf32>
    %464 = vector.multi_reduction <add>, %463, %cst_119 [0] : vector<4x8x128xf32> to vector<8x128xf32>
    %465 = vector.shape_cast %464 : vector<8x128xf32> to vector<1x8x128xf32>
    %466 = vector.shape_cast %465 : vector<1x8x128xf32> to vector<8x128xf32>
    %cst_120 = arith.constant dense<0.000000e+00> : vector<8xf32>
    %467 = vector.multi_reduction <add>, %466, %cst_120 [1] : vector<8x128xf32> to vector<8xf32>
    %468 = vector.shape_cast %467 : vector<8xf32> to vector<8x1xf32>
    %c8_i32 = arith.constant 8 : i32
    %469 = vector.broadcast %c8_i32 : i32 to vector<8x128xi32>
    %470 = arith.cmpi eq, %0, %469 : vector<8x128xi32>
    %cst_121 = arith.constant 0.000000e+00 : f32
    %471 = vector.shape_cast %468 : vector<8x1xf32> to vector<8x1xf32>
    %472 = vector.broadcast %471 : vector<8x1xf32> to vector<8x128xf32>
    %473 = vector.broadcast %cst_121 : f32 to vector<8x128xf32>
    %474 = arith.select %470, %472, %473 : vector<8x128xi1>, vector<8x128xf32>
    %475 = arith.addf %444, %474 : vector<8x128xf32>
    %cst_122 = arith.constant 1.000000e+00 : f32
    %476 = vector.broadcast %cst_122 : f32 to vector<4x8x128xf32>
    %477 = arith.subf %476, %365 : vector<4x8x128xf32>
    %478 = arith.mulf %477, %462 : vector<4x8x128xf32>
    %cst_123 = arith.constant dense<0.000000e+00> : vector<8x128xf32>
    %479 = vector.multi_reduction <add>, %478, %cst_123 [0] : vector<4x8x128xf32> to vector<8x128xf32>
    %480 = vector.shape_cast %479 : vector<8x128xf32> to vector<1x8x128xf32>
    %481 = vector.shape_cast %480 : vector<1x8x128xf32> to vector<8x128xf32>
    %cst_124 = arith.constant dense<0.000000e+00> : vector<8xf32>
    %482 = vector.multi_reduction <add>, %481, %cst_124 [1] : vector<8x128xf32> to vector<8xf32>
    %483 = vector.shape_cast %482 : vector<8xf32> to vector<8x1xf32>
    %c9_i32 = arith.constant 9 : i32
    %484 = vector.broadcast %c9_i32 : i32 to vector<8x128xi32>
    %485 = arith.cmpi eq, %0, %484 : vector<8x128xi32>
    %cst_125 = arith.constant 0.000000e+00 : f32
    %486 = vector.shape_cast %483 : vector<8x1xf32> to vector<8x1xf32>
    %487 = vector.broadcast %486 : vector<8x1xf32> to vector<8x128xf32>
    %488 = vector.broadcast %cst_125 : f32 to vector<8x128xf32>
    %489 = arith.select %485, %487, %488 : vector<8x128xi1>, vector<8x128xf32>
    %490 = arith.addf %475, %489 : vector<8x128xf32>
    %491 = arith.mulf %332, %49 : vector<1x8x128xf32>
    %492 = vector.shape_cast %491 : vector<1x8x128xf32> to vector<8x128xf32>
    %cst_126 = arith.constant dense<0.000000e+00> : vector<8xf32>
    %493 = vector.multi_reduction <add>, %492, %cst_126 [1] : vector<8x128xf32> to vector<8xf32>
    %494 = vector.shape_cast %493 : vector<8xf32> to vector<8x1xf32>
    %c10_i32 = arith.constant 10 : i32
    %495 = vector.broadcast %c10_i32 : i32 to vector<8x128xi32>
    %496 = arith.cmpi eq, %0, %495 : vector<8x128xi32>
    %cst_127 = arith.constant 0.000000e+00 : f32
    %497 = vector.shape_cast %494 : vector<8x1xf32> to vector<8x1xf32>
    %498 = vector.broadcast %497 : vector<8x1xf32> to vector<8x128xf32>
    %499 = vector.broadcast %cst_127 : f32 to vector<8x128xf32>
    %500 = arith.select %496, %498, %499 : vector<8x128xi1>, vector<8x128xf32>
    %501 = arith.addf %490, %500 : vector<8x128xf32>
    %502 = arith.mulf %345, %49 : vector<1x8x128xf32>
    %503 = vector.shape_cast %502 : vector<1x8x128xf32> to vector<8x128xf32>
    %cst_128 = arith.constant dense<0.000000e+00> : vector<8xf32>
    %504 = vector.multi_reduction <add>, %503, %cst_128 [1] : vector<8x128xf32> to vector<8xf32>
    %505 = vector.shape_cast %504 : vector<8xf32> to vector<8x1xf32>
    %c11_i32 = arith.constant 11 : i32
    %506 = vector.broadcast %c11_i32 : i32 to vector<8x128xi32>
    %507 = arith.cmpi eq, %0, %506 : vector<8x128xi32>
    %cst_129 = arith.constant 0.000000e+00 : f32
    %508 = vector.shape_cast %505 : vector<8x1xf32> to vector<8x1xf32>
    %509 = vector.broadcast %508 : vector<8x1xf32> to vector<8x128xf32>
    %510 = vector.broadcast %cst_129 : f32 to vector<8x128xf32>
    %511 = arith.select %507, %509, %510 : vector<8x128xi1>, vector<8x128xf32>
    %512 = arith.addf %501, %511 : vector<8x128xf32>
    %513 = arith.mulf %356, %49 : vector<1x8x128xf32>
    %514 = vector.shape_cast %513 : vector<1x8x128xf32> to vector<8x128xf32>
    %cst_130 = arith.constant dense<0.000000e+00> : vector<8xf32>
    %515 = vector.multi_reduction <add>, %514, %cst_130 [1] : vector<8x128xf32> to vector<8xf32>
    %516 = vector.shape_cast %515 : vector<8xf32> to vector<8x1xf32>
    %c12_i32 = arith.constant 12 : i32
    %517 = vector.broadcast %c12_i32 : i32 to vector<8x128xi32>
    %518 = arith.cmpi eq, %0, %517 : vector<8x128xi32>
    %cst_131 = arith.constant 0.000000e+00 : f32
    %519 = vector.shape_cast %516 : vector<8x1xf32> to vector<8x1xf32>
    %520 = vector.broadcast %519 : vector<8x1xf32> to vector<8x128xf32>
    %521 = vector.broadcast %cst_131 : f32 to vector<8x128xf32>
    %522 = arith.select %518, %520, %521 : vector<8x128xi1>, vector<8x128xf32>
    %523 = arith.addf %512, %522 : vector<8x128xf32>
    %524 = arith.subf %273, %4 : vector<4x8x128xf32>
    %525 = math.absf %524 : vector<4x8x128xf32>
    %526 = vector.broadcast %2 : vector<1x8x128xf32> to vector<4x8x128xf32>
    %527 = arith.mulf %525, %526 : vector<4x8x128xf32>
    %cst_132 = arith.constant 1.000000e+00 : f32
    %528 = vector.broadcast %cst_132 : f32 to vector<4x8x128xf32>
    %529 = arith.cmpf olt, %527, %528 : vector<4x8x128xf32>
    %cst_133 = arith.constant 5.000000e-01 : f32
    %530 = vector.broadcast %cst_133 : f32 to vector<4x8x128xf32>
    %531 = arith.mulf %530, %527 : vector<4x8x128xf32>
    %532 = arith.mulf %531, %527 : vector<4x8x128xf32>
    %cst_134 = arith.constant 5.000000e-01 : f32
    %533 = vector.broadcast %cst_134 : f32 to vector<4x8x128xf32>
    %534 = arith.subf %527, %533 : vector<4x8x128xf32>
    %535 = arith.select %529, %532, %534 : vector<4x8x128xi1>, vector<4x8x128xf32>
    %536 = vector.broadcast %50 : vector<1x8x128xf32> to vector<4x8x128xf32>
    %537 = arith.mulf %535, %536 : vector<4x8x128xf32>
    %cst_135 = arith.constant dense<0.000000e+00> : vector<8x128xf32>
    %538 = vector.multi_reduction <add>, %537, %cst_135 [0] : vector<4x8x128xf32> to vector<8x128xf32>
    %539 = vector.shape_cast %538 : vector<8x128xf32> to vector<1x8x128xf32>
    %540 = vector.shape_cast %539 : vector<1x8x128xf32> to vector<8x128xf32>
    %cst_136 = arith.constant dense<0.000000e+00> : vector<8xf32>
    %541 = vector.multi_reduction <add>, %540, %cst_136 [1] : vector<8x128xf32> to vector<8xf32>
    %542 = vector.shape_cast %541 : vector<8xf32> to vector<8x1xf32>
    %c13_i32 = arith.constant 13 : i32
    %543 = vector.broadcast %c13_i32 : i32 to vector<8x128xi32>
    %544 = arith.cmpi eq, %0, %543 : vector<8x128xi32>
    %cst_137 = arith.constant 0.000000e+00 : f32
    %545 = vector.shape_cast %542 : vector<8x1xf32> to vector<8x1xf32>
    %546 = vector.broadcast %545 : vector<8x1xf32> to vector<8x128xf32>
    %547 = vector.broadcast %cst_137 : f32 to vector<8x128xf32>
    %548 = arith.select %544, %546, %547 : vector<8x128xi1>, vector<8x128xf32>
    %549 = arith.addf %523, %548 : vector<8x128xf32>
    %550 = vector.shape_cast %14 : vector<1x8x128xf32> to vector<8x128xf32>
    %cst_138 = arith.constant dense<0.000000e+00> : vector<8xf32>
    %551 = vector.multi_reduction <add>, %550, %cst_138 [1] : vector<8x128xf32> to vector<8xf32>
    %552 = vector.shape_cast %551 : vector<8xf32> to vector<8x1xf32>
    %c14_i32 = arith.constant 14 : i32
    %553 = vector.broadcast %c14_i32 : i32 to vector<8x128xi32>
    %554 = arith.cmpi eq, %0, %553 : vector<8x128xi32>
    %cst_139 = arith.constant 0.000000e+00 : f32
    %555 = vector.shape_cast %552 : vector<8x1xf32> to vector<8x1xf32>
    %556 = vector.broadcast %555 : vector<8x1xf32> to vector<8x128xf32>
    %557 = vector.broadcast %cst_139 : f32 to vector<8x128xf32>
    %558 = arith.select %554, %556, %557 : vector<8x128xi1>, vector<8x128xf32>
    %559 = arith.addf %549, %558 : vector<8x128xf32>
    %560 = vector.shape_cast %382 : vector<1x8x128xf32> to vector<8x128xf32>
    %cst_140 = arith.constant dense<0.000000e+00> : vector<8xf32>
    %561 = vector.multi_reduction <add>, %560, %cst_140 [1] : vector<8x128xf32> to vector<8xf32>
    %562 = vector.shape_cast %561 : vector<8xf32> to vector<8x1xf32>
    %c15_i32 = arith.constant 15 : i32
    %563 = vector.broadcast %c15_i32 : i32 to vector<8x128xi32>
    %564 = arith.cmpi eq, %0, %563 : vector<8x128xi32>
    %cst_141 = arith.constant 0.000000e+00 : f32
    %565 = vector.shape_cast %562 : vector<8x1xf32> to vector<8x1xf32>
    %566 = vector.broadcast %565 : vector<8x1xf32> to vector<8x128xf32>
    %567 = vector.broadcast %cst_141 : f32 to vector<8x128xf32>
    %568 = arith.select %564, %566, %567 : vector<8x128xi1>, vector<8x128xf32>
    %569 = arith.addf %559, %568 : vector<8x128xf32>
    %c0_142 = arith.constant 0 : index
    %c0_143 = arith.constant 0 : index
    %570 = vector.load %arg2[%c0_142, %c0_143] : memref<8x128xf32, #tpu.memory_space<vmem>>, vector<8x128xf32>
    tpu.vector_store %arg2[%c0_142, %c0_143], %569 {strides = array<i32>} : memref<8x128xf32, #tpu.memory_space<vmem>>, vector<8x128xf32>,
    return
  }
  func.func @transform_0(%arg0: i32) -> (i32, i32, i32) {
    %c0_i32 = arith.constant 0 : i32
    %c0_i32_0 = arith.constant 0 : i32
    %c0_i32_1 = arith.constant 0 : i32
    return %c0_i32, %arg0, %c0_i32_0 : i32, i32, i32
  }
  func.func @transform_1(%arg0: i32) -> (i32, i32) {
    %c0_i32 = arith.constant 0 : i32
    %c0_i32_0 = arith.constant 0 : i32
    return %arg0, %c0_i32 : i32, i32
  }
}

</mosaic_0001>

<llo_original>
// kernel: _loss_forward_impl.1
$region0: #{_loss_forward_impl.1}
  #allocation0 [shape = 'u32[]', space=smem, size = 0x4, offset = 0x4, fixed_abs, tag = 'smem constant byte address 0x4 - core index']
  #allocation1 [shape = 'u32[144,128]{1,0:T(1,128)}', space=vmem, size = 0x12000, scoped, tag = 'internal scratch']
  %s0 = inlined_call_operand.vmem [shape: f32[43,8,128], index: 0, kind: input, shape index: {}]
  %s1 = inlined_call_operand.vmem [shape: f32[8,128], index: 1, kind: output, shape index: {}]
  %s2 = sld [smem:[#allocation0]]
  $region14: #{_loss_forward_impl.1} parent=0
    _
  %s4 = ssub.s32 1, %s2
  %s5 = scalar_select 0, %s4, %s2
  // Predicated region
  $region2: #{_loss_forward_impl.1} parent=0 // pred_check
    _
  $region3: #{_loss_forward_impl.1} parent=0 // pred_check_branch
    %7 = sbr.rel (0) target = $region5
  $region4: #{_loss_forward_impl.1} parent=0 // pred_region
    _
  $region5: #{_loss_forward_impl.1} parent=0 // pred_fallthru
    _
  %v8 = vlaneseq
  %v9 = vand.u32 %v8, 127
  %s10 = scalar_lea.vmem %s0, 328
  %v11 = vld [vmem:[%s10] sm:$0xff]
  %s12 = scalar_lea.vmem %s0, 336
  %v13 = vld [vmem:[%s12] sm:$0xff]
  %s14 = scalar_lea.vmem %s0, 192
  %v15 = vld [vmem:[%s14] sm:$0xff]
  %v16 = vld [vmem:[%s14 + $0x8] sm:$0xff]
  %v17 = vld [vmem:[%s14 + $0x10] sm:$0xff]
  %v18 = vld [vmem:[%s14 + $0x18] sm:$0xff]
  %s19 = scalar_lea.vmem %s0, 224
  %v20 = vld [vmem:[%s19] sm:$0xff]
  %v21 = vld [vmem:[%s19 + $0x8] sm:$0xff]
  %v22 = vld [vmem:[%s19 + $0x10] sm:$0xff]
  %v23 = vld [vmem:[%s19 + $0x18] sm:$0xff]
  %s24 = scalar_lea.vmem %s0, 256
  %v25 = vld [vmem:[%s24] sm:$0xff]
  %s26 = scalar_lea.vmem %s0, 264
  %v27 = vld [vmem:[%s26] sm:$0xff]
  %s28 = scalar_lea.vmem %s0, 272
  %v29 = vld [vmem:[%s28] sm:$0xff]
  %s30 = scalar_lea.vmem %s0, 280
  %v31 = vld [vmem:[%s30] sm:$0xff]
  %s32 = scalar_lea.vmem %s0, 288
  %v33 = vld [vmem:[%s32] sm:$0xff]
  %v34 = vld [vmem:[%s32 + $0x8] sm:$0xff]
  %v35 = vld [vmem:[%s32 + $0x10] sm:$0xff]
  %v36 = vld [vmem:[%s32 + $0x18] sm:$0xff]
  %vm37 = vcmp.eq.f32.partialorder %v27, 1.0
  %v38 = vsel %vm37, 1, 0
  %v39 = vcvt.s32.f32 %v38
  %vm40 = vcmp.ne.f32.partialorder %v27, 0.0
  %v41 = vsel %vm40, 1, 0
  %v42 = vcvt.s32.f32 %v41
  %v43 = vsub.f32 1.0, %v42
  %v44 = vsub.f32 1.0, %v39
  %v45 = vsub.f32 %v44, %v43
  %v46 = vmax.f32 %v33, %v34
  %v47 = vmax.f32 %v35, %v36
  %v48 = vmax.f32 %v46, %v47
  %v49 = vadd.f32 %v16, %v18
  %v50 = vadd.f32 %v15, %v17
  %v51 = vmul.f32 %v49, %v50
  %v52 = vmul.f32 %v51, %v13
  %v53 = vsub.f32 2.0, %v52
  %vm54 = vcmp.eq.f32.partialorder %v31, 0.0
  %v55 = vsel %vm54, 1, 0
  %v56 = vcvt.s32.f32 %v55
  %v57 = vadd.f32 %v31, %v56
  %v58 = vsub.f32 2.0, %v25
  %v59 = vmul.f32 %v39, %v57
  %v60 = vmul.f32 %v59, %v29
  %v61 = vmul.f32 %v60, %v58
  %v62 = vmul.f32 %v61, %v53
  %v63 = vmul.f32 %v39, %v29
  %v64 = vmul.f32 %v63, %v57
  %s65 = scalar_lea.vmem %s0, 48
  %v66 = vld [vmem:[%s65] sm:$0xff]
  %v67 = vld [vmem:[%s65 + $0x8] sm:$0xff]
  %v68 = vld [vmem:[%s65 + $0x10] sm:$0xff]
  %v69 = vld [vmem:[%s65 + $0x18] sm:$0xff]
  %v70 = vadd.f32 %v66, %v68
  %v71 = vadd.f32 %v67, %v69
  %v72 = vmul.f32 %v70, %v71
  %v73 = vmin.f32 %v66, %v15
  %v74 = vmin.f32 %v68, %v17
  %v75 = vadd.f32 %v73, %v74
  %v76 = vmin.f32 %v67, %v16
  %v77 = vmin.f32 %v69, %v18
  %v78 = vadd.f32 %v76, %v77
  %v79 = vmul.f32 %v75, %v78
  %v80 = vadd.f32 %v72, %v51
  %v81 = vsub.f32 %v80, %v79
  %v82 = vadd.f32 %v81, 1e-16
  %v83 = vrcp.pop %v82
  %v84 = vmul.f32 %v79, %v83
  %v85 = vmax.f32 %v66, %v15
  %v86 = vmax.f32 %v68, %v17
  %v87 = vadd.f32 %v85, %v86
  %v88 = vmax.f32 %v67, %v16
  %v89 = vmax.f32 %v69, %v18
  %v90 = vadd.f32 %v88, %v89
  %v91 = vmul.f32 %v87, %v90
  %v92 = vsub.f32 %v91, %v81
  %v93 = vadd.f32 %v91, 1e-16
  %v94 = vrcp.pop %v93
  %v95 = vmul.f32 %v92, %v94
  %v96 = vsub.f32 %v84, %v95
  %v97 = vsub.f32 1.0, %v96
  %v98 = vmul.f32 %v53, %v97
  %s99 = scalar_lea.vmem %s0, 8
  %v100 = vld [vmem:[%s99] sm:$0xff]
  %v101 = vld [vmem:[%s99 + $0x8] sm:$0xff]
  %v102 = vld [vmem:[%s99 + $0x10] sm:$0xff]
  %v103 = vld [vmem:[%s99 + $0x18] sm:$0xff]
  %v104 = vsub.f32 %v100, %v20
  %v105 = vsub.f32 %v101, %v21
  %v106 = vsub.f32 %v102, %v22
  %v107 = vsub.f32 %v103, %v23
  %v108 = vand.u32 2147483647, %v104
  %v109 = vand.u32 2147483647, %v105
  %v110 = vand.u32 2147483647, %v106
  %v111 = vand.u32 2147483647, %v107
  %vm112 = vcmp.lt.f32.partialorder %v108, 1.0
  %vm113 = vcmp.lt.f32.partialorder %v109, 1.0
  %vm114 = vcmp.lt.f32.partialorder %v110, 1.0
  %vm115 = vcmp.lt.f32.partialorder %v111, 1.0
  %v116 = vmul.f32 %v108, 0.5
  %v117 = vmul.f32 %v109, 0.5
  %v118 = vmul.f32 %v110, 0.5
  %v119 = vmul.f32 %v111, 0.5
  %v120 = vmul.f32 %v116, %v108
  %v121 = vmul.f32 %v117, %v109
  %v122 = vmul.f32 %v118, %v110
  %v123 = vmul.f32 %v119, %v111
  %v124 = vsub.f32 %v108, 0.5
  %v125 = vsub.f32 %v109, 0.5
  %v126 = vsub.f32 %v110, 0.5
  %v127 = vsub.f32 %v111, 0.5
  %v128 = vsel %vm112, %v120, %v124
  %v129 = vsel %vm113, %v121, %v125
  %v130 = vsel %vm114, %v122, %v126
  %v131 = vsel %vm115, %v123, %v127
  %v132 = vadd.f32 %v128, %v129
  %v133 = vadd.f32 %v132, %v130
  %v134 = vadd.f32 %v133, %v131
  %s135 = scalar_lea.vmem %s0, 40
  %v136 = vld [vmem:[%s135] sm:$0xff]
  %v137 = vsub.f32 %v136, %v25
  %v138 = vand.u32 2147483647, %v137
  %vm139 = vcmp.lt.f32.partialorder %v138, 1.0
  %v140 = vmul.f32 %v138, 0.5
  %v141 = vmul.f32 %v140, %v138
  %v142 = vsub.f32 %v138, 0.5
  %v143 = vsel %vm139, %v141, %v142
  %v144 = vadd.f32 %v98, %v134
  %v145 = vadd.f32 %v144, %v143
  %v146 = vsub.f32 0.0, %v145
  %v147 = vmul.f32 %v146, 1.442695
  %v148 = vpow.pop %v147
  %v149 = vmul.f32 %v45, %v48
  %v150 = vmul.f32 %v149, 0.5
  %v151 = vmul.f32 %v148, 0.5
  %v152 = vadd.f32 %v150, %v151
  %vm153 = vcmp.lt.f32.partialorder %v152, 0.3
  %v154 = vsel %vm153, 1, 0
  %v155 = vcvt.s32.f32 %v154
  %v156 = vmul.f32 %v45, %v155
  %v157 = vmul.f32 %v45, %v152
  %v158 = vsub.f32 1.0, %v157
  %v159 = vmul.f32 %v156, %v158
  %v160 = vadd.f32 %v43, %v159
  %v161 = vmul.f32 %v39, %v48
  %v162 = vmul.f32 %v161, 0.5
  %v163 = vadd.f32 %v162, %v151
  %v164 = vmul.f32 %v39, %v163
  %v165 = vmul.f32 %v39, 0.95
  %v166 = vadd.f32 %v165, 0.025
  %v167 = vld [vmem:[%s0] sm:$0xff]
  %v168 = vxor.u32 %v167, 2147483648
  %v169 = vmul.f32 %v168, 1.442695
  %v170 = vpow.pop %v169
  %v171 = vadd.f32 %v170, 1.0
  %v172 = vrcp.pop %v171
  %v173 = vmul.f32 1.0, %v172
  %v174 = vsub.f32 %v166, %v173
  %v175 = vand.u32 2147483647, %v174
  %v176 = vmax.f32 %v167, 0.0
  %v177 = vmul.f32 %v167, %v166
  %v178 = vsub.f32 %v176, %v177
  %v179 = vand.u32 2147483647, %v167
  %v180 = vsub.f32 0.0, %v179
  %v181 = vmul.f32 %v180, 1.442695
  %v182 = vpow.pop %v181
  %v183 = vadd.f32 %v182, 1.0
  %v184 = vlog2.pop %v183
  %v185 = vmul.f32 %v184, 0.6931472
  %v186 = vadd.f32 %v178, %v185
  %v187 = vmul.f32 %v186, %v175
  %v188 = vmul.f32 %v187, %v175
  %v189 = vmul.f32 %v188, %v29
  %v190 = vmul.f32 %v164, %v189
  %191 = vadd.xlane.f32.xlu0 %v190
  %v192 = vpop.xlane.xlu0 %191
  %vm193 = vcmp.eq.s32.totalorder %v9, 0
  %v194 = vsel %vm193, %v192, 0.0
  %v195 = vadd.f32 %v194, 0.0
  %v196 = vmul.f32 %v160, %v189
  %197 = vadd.xlane.f32.xlu0 %v196
  %v198 = vpop.xlane.xlu0 %197
  %vm199 = vcmp.eq.s32.totalorder %v9, 1
  %v200 = vsel %vm199, %v198, 0.0
  %v201 = vadd.f32 %v195, %v200
  %v202 = vmul.f32 %v98, %v61
  %203 = vadd.xlane.f32.xlu0 %v202
  %v204 = vpop.xlane.xlu0 %203
  %vm205 = vcmp.eq.s32.totalorder %v9, 2
  %v206 = vsel %vm205, %v204, 0.0
  %v207 = vadd.f32 %v201, %v206
  %v208 = vmul.f32 %v134, %v61
  %209 = vadd.xlane.f32.xlu0 %v208
  %v210 = vpop.xlane.xlu0 %209
  %vm211 = vcmp.eq.s32.totalorder %v9, 3
  %v212 = vsel %vm211, %v210, 0.0
  %v213 = vadd.f32 %v207, %v212
  %v214 = vmul.f32 %v143, %v61
  %215 = vadd.xlane.f32.xlu0 %v214
  %v216 = vpop.xlane.xlu0 %215
  %vm217 = vcmp.eq.s32.totalorder %v9, 4
  %v218 = vsel %vm217, %v216, 0.0
  %v219 = vadd.f32 %v213, %v218
  %v220 = vsub.f32 %v66, %v15
  %v221 = vsub.f32 %v67, %v16
  %v222 = vsub.f32 %v68, %v17
  %v223 = vsub.f32 %v69, %v18
  %v224 = vand.u32 2147483647, %v220
  %v225 = vand.u32 2147483647, %v221
  %v226 = vand.u32 2147483647, %v222
  %v227 = vand.u32 2147483647, %v223
  %v228 = vmul.f32 %v224, %v11
  %v229 = vmul.f32 %v225, %v11
  %v230 = vmul.f32 %v226, %v11
  %v231 = vmul.f32 %v227, %v11
  %vm232 = vcmp.lt.f32.partialorder %v228, 1.0
  %vm233 = vcmp.lt.f32.partialorder %v229, 1.0
  %vm234 = vcmp.lt.f32.partialorder %v230, 1.0
  %vm235 = vcmp.lt.f32.partialorder %v231, 1.0
  %v236 = vmul.f32 %v228, 0.5
  %v237 = vmul.f32 %v229, 0.5
  %v238 = vmul.f32 %v230, 0.5
  %v239 = vmul.f32 %v231, 0.5
  %v240 = vmul.f32 %v236, %v228
  %v241 = vmul.f32 %v237, %v229
  %v242 = vmul.f32 %v238, %v230
  %v243 = vmul.f32 %v239, %v231
  %v244 = vsub.f32 %v228, 0.5
  %v245 = vsub.f32 %v229, 0.5
  %v246 = vsub.f32 %v230, 0.5
  %v247 = vsub.f32 %v231, 0.5
  %v248 = vsel %vm232, %v240, %v244
  %v249 = vsel %vm233, %v241, %v245
  %v250 = vsel %vm234, %v242, %v246
  %v251 = vsel %vm235, %v243, %v247
  %v252 = vmul.f32 %v248, %v62
  %v253 = vmul.f32 %v249, %v62
  %v254 = vmul.f32 %v250, %v62
  %v255 = vmul.f32 %v251, %v62
  %v256 = vadd.f32 %v252, %v253
  %v257 = vadd.f32 %v256, %v254
  %v258 = vadd.f32 %v257, %v255
  %259 = vadd.xlane.f32.xlu0 %v258
  %v260 = vpop.xlane.xlu0 %259
  %vm261 = vcmp.eq.s32.totalorder %v9, 5
  %v262 = vsel %vm261, %v260, 0.0
  %v263 = vadd.f32 %v219, %v262
  %s264 = scalar_lea.vmem %s0, 160
  %v265 = vld [vmem:[%s264] sm:$0xff]
  %v266 = vld [vmem:[%s264 + $0x8] sm:$0xff]
  %v267 = vld [vmem:[%s264 + $0x10] sm:$0xff]
  %v268 = vld [vmem:[%s264 + $0x18] sm:$0xff]
  %v269 = vadd.f32 %v265, %v267
  %v270 = vadd.f32 %v266, %v268
  %v271 = vmul.f32 %v269, %v270
  %v272 = vmin.f32 %v265, %v15
  %v273 = vmin.f32 %v267, %v17
  %v274 = vadd.f32 %v272, %v273
  %v275 = vmin.f32 %v266, %v16
  %v276 = vmin.f32 %v268, %v18
  %v277 = vadd.f32 %v275, %v276
  %v278 = vmul.f32 %v274, %v277
  %v279 = vadd.f32 %v271, %v51
  %v280 = vsub.f32 %v279, %v278
  %v281 = vadd.f32 %v280, 1e-16
  %v282 = vrcp.pop %v281
  %v283 = vmul.f32 %v278, %v282
  %v284 = vmax.f32 %v265, %v15
  %v285 = vmax.f32 %v267, %v17
  %v286 = vadd.f32 %v284, %v285
  %v287 = vmax.f32 %v266, %v16
  %v288 = vmax.f32 %v268, %v18
  %v289 = vadd.f32 %v287, %v288
  %v290 = vmul.f32 %v286, %v289
  %v291 = vsub.f32 %v290, %v280
  %v292 = vadd.f32 %v290, 1e-16
  %v293 = vrcp.pop %v292
  %v294 = vmul.f32 %v291, %v293
  %v295 = vsub.f32 %v283, %v294
  %v296 = vsub.f32 1.0, %v295
  %v297 = vmul.f32 %v53, %v296
  %s298 = scalar_lea.vmem %s0, 120
  %v299 = vld [vmem:[%s298] sm:$0xff]
  %v300 = vld [vmem:[%s298 + $0x8] sm:$0xff]
  %v301 = vld [vmem:[%s298 + $0x10] sm:$0xff]
  %v302 = vld [vmem:[%s298 + $0x18] sm:$0xff]
  %v303 = vsub.f32 %v299, %v20
  %v304 = vsub.f32 %v300, %v21
  %v305 = vsub.f32 %v301, %v22
  %v306 = vsub.f32 %v302, %v23
  %v307 = vand.u32 2147483647, %v303
  %v308 = vand.u32 2147483647, %v304
  %v309 = vand.u32 2147483647, %v305
  %v310 = vand.u32 2147483647, %v306
  %vm311 = vcmp.lt.f32.partialorder %v307, 1.0
  %vm312 = vcmp.lt.f32.partialorder %v308, 1.0
  %vm313 = vcmp.lt.f32.partialorder %v309, 1.0
  %vm314 = vcmp.lt.f32.partialorder %v310, 1.0
  %v315 = vmul.f32 %v307, 0.5
  %v316 = vmul.f32 %v308, 0.5
  %v317 = vmul.f32 %v309, 0.5
  %v318 = vmul.f32 %v310, 0.5
  %v319 = vmul.f32 %v315, %v307
  %v320 = vmul.f32 %v316, %v308
  %v321 = vmul.f32 %v317, %v309
  %v322 = vmul.f32 %v318, %v310
  %v323 = vsub.f32 %v307, 0.5
  %v324 = vsub.f32 %v308, 0.5
  %v325 = vsub.f32 %v309, 0.5
  %v326 = vsub.f32 %v310, 0.5
  %v327 = vsel %vm311, %v319, %v323
  %v328 = vsel %vm312, %v320, %v324
  %v329 = vsel %vm313, %v321, %v325
  %v330 = vsel %vm314, %v322, %v326
  %v331 = vadd.f32 %v327, %v328
  %v332 = vadd.f32 %v331, %v329
  %v333 = vadd.f32 %v332, %v330
  %s334 = scalar_lea.vmem %s0, 152
  %v335 = vld [vmem:[%s334] sm:$0xff]
  %v336 = vsub.f32 %v335, %v25
  %v337 = vand.u32 2147483647, %v336
  %vm338 = vcmp.lt.f32.partialorder %v337, 1.0
  %v339 = vmul.f32 %v337, 0.5
  %v340 = vmul.f32 %v339, %v337
  %v341 = vsub.f32 %v337, 0.5
  %v342 = vsel %vm338, %v340, %v341
  %v343 = vadd.f32 %v297, %v333
  %v344 = vadd.f32 %v343, %v342
  %v345 = vsub.f32 0.0, %v344
  %v346 = vmul.f32 %v345, 1.442695
  %v347 = vpow.pop %v346
  %vm348 = vcmp.ne.f32.partialorder %v33, 0.0
  %vm349 = vcmp.ne.f32.partialorder %v34, 0.0
  %vm350 = vcmp.ne.f32.partialorder %v35, 0.0
  %vm351 = vcmp.ne.f32.partialorder %v36, 0.0
  %v352 = vsel %vm348, 1, 0
  %v353 = vsel %vm349, 1, 0
  %v354 = vsel %vm350, 1, 0
  %v355 = vsel %vm351, 1, 0
  %v356 = vcvt.s32.f32 %v352
  %v357 = vcvt.s32.f32 %v353
  %v358 = vcvt.s32.f32 %v354
  %v359 = vcvt.s32.f32 %v355
  %s360 = scalar_lea.vmem %s0, 88
  %v361 = vld [vmem:[%s360] sm:$0xff]
  %v362 = vld [vmem:[%s360 + $0x8] sm:$0xff]
  %v363 = vld [vmem:[%s360 + $0x10] sm:$0xff]
  %v364 = vld [vmem:[%s360 + $0x18] sm:$0xff]
  %v365 = vxor.u32 %v361, 2147483648
  %v366 = vxor.u32 %v362, 2147483648
  %v367 = vxor.u32 %v363, 2147483648
  %v368 = vxor.u32 %v364, 2147483648
  %v369 = vmul.f32 %v365, 1.442695
  %v370 = vpow.pop %v369
  %v371 = vmul.f32 %v366, 1.442695
  %v372 = vpow.pop %v371
  %v373 = vmul.f32 %v367, 1.442695
  %v374 = vpow.pop %v373
  %v375 = vmul.f32 %v368, 1.442695
  %v376 = vpow.pop %v375
  %v377 = vadd.f32 %v370, 1.0
  %v378 = vadd.f32 %v372, 1.0
  %v379 = vadd.f32 %v374, 1.0
  %v380 = vadd.f32 %v376, 1.0
  %v381 = vrcp.pop %v377
  %v382 = vmul.f32 1.0, %v381
  %v383 = vrcp.pop %v378
  %v384 = vmul.f32 1.0, %v383
  %v385 = vrcp.pop %v379
  %v386 = vmul.f32 1.0, %v385
  %v387 = vrcp.pop %v380
  %v388 = vmul.f32 1.0, %v387
  %v389 = vmul.f32 %v356, %v382
  %v390 = vmul.f32 %v357, %v384
  %v391 = vmul.f32 %v358, %v386
  %v392 = vmul.f32 %v359, %v388
  %v393 = vmax.f32 %v389, %v390
  %v394 = vmax.f32 %v391, %v392
  %v395 = vmax.f32 %v393, %v394
  %v396 = vmul.f32 %v395, %v347
  %v397 = vrsqrt.pop %v396
  %v398 = vmul.f32 %v396, %v397
  %vm399 = vcmp.eq.f32.partialorder %v396, inf
  %v400 = vsel %vm399, %v396, %v398
  %vm401 = vcmp.eq.f32.partialorder %v396, 0.0
  %v402 = vand.u32 %v396, 2147483648
  %v403 = vsel %vm401, %v402, %v400
  %s404 = scalar_lea.vmem %s0, 320
  %v405 = vld [vmem:[%s404] sm:$0xff]
  %vm406 = vcmp.ne.f32.partialorder %v405, 0.0
  %v407 = vsel %vm406, 1, 0
  %v408 = vcvt.s32.f32 %v407
  %v409 = vmul.f32 %v39, %v408
  %v410 = vmul.f32 %v48, 0.3
  %v411 = vmul.f32 %v408, 0.7
  %v412 = vmul.f32 %v411, %v403
  %v413 = vadd.f32 %v410, %v412
  %v414 = vmul.f32 %v39, %v413
  %vm415 = vcmp.lt.f32.partialorder %v403, 0.3
  %v416 = vsel %vm415, 1, 0
  %v417 = vcvt.s32.f32 %v416
  %v418 = vmul.f32 %v45, %v417
  %v419 = vmul.f32 %v45, %v403
  %v420 = vsub.f32 1.0, %v419
  %v421 = vmul.f32 %v418, %v420
  %v422 = vadd.f32 %v43, %v421
  %s423 = scalar_lea.vmem %s0, 80
  %v424 = vld [vmem:[%s423] sm:$0xff]
  %v425 = vxor.u32 %v424, 2147483648
  %v426 = vmul.f32 %v425, 1.442695
  %v427 = vpow.pop %v426
  %v428 = vadd.f32 %v427, 1.0
  %v429 = vrcp.pop %v428
  %v430 = vmul.f32 1.0, %v429
  %v431 = vsub.f32 %v347, %v430
  %v432 = vand.u32 2147483647, %v431
  %v433 = vmax.f32 %v424, 0.0
  %v434 = vmul.f32 %v424, %v347
  %v435 = vsub.f32 %v433, %v434
  %v436 = vand.u32 2147483647, %v424
  %v437 = vsub.f32 0.0, %v436
  %v438 = vmul.f32 %v437, 1.442695
  %v439 = vpow.pop %v438
  %v440 = vadd.f32 %v439, 1.0
  %v441 = vlog2.pop %v440
  %v442 = vmul.f32 %v441, 0.6931472
  %v443 = vadd.f32 %v435, %v442
  %v444 = vmul.f32 %v443, %v432
  %v445 = vmul.f32 %v444, %v432
  %v446 = vmul.f32 %v445, %v29
  %v447 = vmul.f32 %v414, %v446
  %448 = vadd.xlane.f32.xlu0 %v447
  %v449 = vpop.xlane.xlu0 %448
  %vm450 = vcmp.eq.s32.totalorder %v9, 6
  %v451 = vsel %vm450, %v449, 0.0
  %v452 = vadd.f32 %v263, %v451
  %v453 = vmul.f32 %v422, %v446
  %454 = vadd.xlane.f32.xlu0 %v453
  %v455 = vpop.xlane.xlu0 %454
  %vm456 = vcmp.eq.s32.totalorder %v9, 7
  %v457 = vsel %vm456, %v455, 0.0
  %v458 = vadd.f32 %v452, %v457
  %v459 = vmul.f32 %v356, 0.9
  %v460 = vmul.f32 %v357, 0.9
  %v461 = vmul.f32 %v358, 0.9
  %v462 = vmul.f32 %v359, 0.9
  %v463 = vadd.f32 %v459, 0.025
  %v464 = vadd.f32 %v460, 0.025
  %v465 = vadd.f32 %v461, 0.025
  %v466 = vadd.f32 %v462, 0.025
  %v467 = vmax.f32 %v361, 0.0
  %v468 = vmax.f32 %v362, 0.0
  %v469 = vmax.f32 %v363, 0.0
  %v470 = vmax.f32 %v364, 0.0
  %v471 = vmul.f32 %v361, %v463
  %v472 = vmul.f32 %v362, %v464
  %v473 = vmul.f32 %v363, %v465
  %v474 = vmul.f32 %v364, %v466
  %v475 = vsub.f32 %v467, %v471
  %v476 = vsub.f32 %v468, %v472
  %v477 = vsub.f32 %v469, %v473
  %v478 = vsub.f32 %v470, %v474
  %v479 = vand.u32 2147483647, %v361
  %v480 = vand.u32 2147483647, %v362
  %v481 = vand.u32 2147483647, %v363
  %v482 = vand.u32 2147483647, %v364
  %v483 = vsub.f32 0.0, %v479
  %v484 = vsub.f32 0.0, %v480
  %v485 = vsub.f32 0.0, %v481
  %v486 = vsub.f32 0.0, %v482
  %v487 = vmul.f32 %v483, 1.442695
  %v488 = vpow.pop %v487
  %v489 = vmul.f32 %v484, 1.442695
  %v490 = vpow.pop %v489
  %v491 = vmul.f32 %v485, 1.442695
  %v492 = vpow.pop %v491
  %v493 = vmul.f32 %v486, 1.442695
  %v494 = vpow.pop %v493
  %v495 = vadd.f32 %v488, 1.0
  %v496 = vadd.f32 %v490, 1.0
  %v497 = vadd.f32 %v492, 1.0
  %v498 = vadd.f32 %v494, 1.0
  %v499 = vlog2.pop %v495
  %v500 = vmul.f32 %v499, 0.6931472
  %v501 = vlog2.pop %v496
  %v502 = vmul.f32 %v501, 0.6931472
  %v503 = vlog2.pop %v497
  %v504 = vmul.f32 %v503, 0.6931472
  %v505 = vlog2.pop %v498
  %v506 = vmul.f32 %v505, 0.6931472
  %v507 = vadd.f32 %v475, %v500
  %v508 = vadd.f32 %v476, %v502
  %v509 = vadd.f32 %v477, %v504
  %v510 = vadd.f32 %v478, %v506
  %v511 = vmul.f32 %v507, %v64
  %v512 = vmul.f32 %v508, %v64
  %v513 = vmul.f32 %v509, %v64
  %v514 = vmul.f32 %v510, %v64
  %v515 = vmul.f32 %v356, %v511
  %v516 = vmul.f32 %v357, %v512
  %v517 = vmul.f32 %v358, %v513
  %v518 = vmul.f32 %v359, %v514
  %v519 = vadd.f32 %v515, %v516
  %v520 = vadd.f32 %v519, %v517
  %v521 = vadd.f32 %v520, %v518
  %522 = vadd.xlane.f32.xlu0 %v521
  %v523 = vpop.xlane.xlu0 %522
  %vm524 = vcmp.eq.s32.totalorder %v9, 8
  %v525 = vsel %vm524, %v523, 0.0
  %v526 = vadd.f32 %v458, %v525
  %v527 = vsub.f32 1.0, %v356
  %v528 = vsub.f32 1.0, %v357
  %v529 = vsub.f32 1.0, %v358
  %v530 = vsub.f32 1.0, %v359
  %v531 = vmul.f32 %v527, %v511
  %v532 = vmul.f32 %v528, %v512
  %v533 = vmul.f32 %v529, %v513
  %v534 = vmul.f32 %v530, %v514
  %v535 = vadd.f32 %v531, %v532
  %v536 = vadd.f32 %v535, %v533
  %v537 = vadd.f32 %v536, %v534
  %538 = vadd.xlane.f32.xlu0 %v537
  %v539 = vpop.xlane.xlu0 %538
  %vm540 = vcmp.eq.s32.totalorder %v9, 9
  %v541 = vsel %vm540, %v539, 0.0
  %v542 = vadd.f32 %v526, %v541
  %v543 = vmul.f32 %v297, %v61
  %544 = vadd.xlane.f32.xlu0 %v543
  %v545 = vpop.xlane.xlu0 %544
  %vm546 = vcmp.eq.s32.totalorder %v9, 10
  %v547 = vsel %vm546, %v545, 0.0
  %v548 = vadd.f32 %v542, %v547
  %v549 = vmul.f32 %v333, %v61
  %550 = vadd.xlane.f32.xlu0 %v549
  %v551 = vpop.xlane.xlu0 %550
  %vm552 = vcmp.eq.s32.totalorder %v9, 11
  %v553 = vsel %vm552, %v551, 0.0
  %v554 = vadd.f32 %v548, %v553
  %v555 = vmul.f32 %v342, %v61
  %556 = vadd.xlane.f32.xlu0 %v555
  %v557 = vpop.xlane.xlu0 %556
  %vm558 = vcmp.eq.s32.totalorder %v9, 12
  %v559 = vsel %vm558, %v557, 0.0
  %v560 = vadd.f32 %v554, %v559
  %v561 = vsub.f32 %v265, %v15
  %v562 = vsub.f32 %v266, %v16
  %v563 = vsub.f32 %v267, %v17
  %v564 = vsub.f32 %v268, %v18
  %v565 = vand.u32 2147483647, %v561
  %v566 = vand.u32 2147483647, %v562
  %v567 = vand.u32 2147483647, %v563
  %v568 = vand.u32 2147483647, %v564
  %v569 = vmul.f32 %v565, %v11
  %v570 = vmul.f32 %v566, %v11
  %v571 = vmul.f32 %v567, %v11
  %v572 = vmul.f32 %v568, %v11
  %vm573 = vcmp.lt.f32.partialorder %v569, 1.0
  %vm574 = vcmp.lt.f32.partialorder %v570, 1.0
  %vm575 = vcmp.lt.f32.partialorder %v571, 1.0
  %vm576 = vcmp.lt.f32.partialorder %v572, 1.0
  %v577 = vmul.f32 %v569, 0.5
  %v578 = vmul.f32 %v570, 0.5
  %v579 = vmul.f32 %v571, 0.5
  %v580 = vmul.f32 %v572, 0.5
  %v581 = vmul.f32 %v577, %v569
  %v582 = vmul.f32 %v578, %v570
  %v583 = vmul.f32 %v579, %v571
  %v584 = vmul.f32 %v580, %v572
  %v585 = vsub.f32 %v569, 0.5
  %v586 = vsub.f32 %v570, 0.5
  %v587 = vsub.f32 %v571, 0.5
  %v588 = vsub.f32 %v572, 0.5
  %v589 = vsel %vm573, %v581, %v585
  %v590 = vsel %vm574, %v582, %v586
  %v591 = vsel %vm575, %v583, %v587
  %v592 = vsel %vm576, %v584, %v588
  %v593 = vmul.f32 %v589, %v62
  %v594 = vmul.f32 %v590, %v62
  %v595 = vmul.f32 %v591, %v62
  %v596 = vmul.f32 %v592, %v62
  %v597 = vadd.f32 %v593, %v594
  %v598 = vadd.f32 %v597, %v595
  %v599 = vadd.f32 %v598, %v596
  %600 = vadd.xlane.f32.xlu0 %v599
  %v601 = vpop.xlane.xlu0 %600
  %vm602 = vcmp.eq.s32.totalorder %v9, 13
  %v603 = vsel %vm602, %v601, 0.0
  %v604 = vadd.f32 %v560, %v603
  %605 = vadd.xlane.f32.xlu0 %v39
  %v606 = vpop.xlane.xlu0 %605
  %vm607 = vcmp.eq.s32.totalorder %v9, 14
  %v608 = vsel %vm607, %v606, 0.0
  %v609 = vadd.f32 %v604, %v608
  %610 = vadd.xlane.f32.xlu0 %v409
  %v611 = vpop.xlane.xlu0 %610
  %vm612 = vcmp.eq.s32.totalorder %v9, 15
  %v613 = vsel %vm612, %v611, 0.0
  %v614 = vadd.f32 %v609, %v613
  %615 = vst [vmem:[%s1] sm:$0xff] %v614
  // Predicated region
  $region6: #{_loss_forward_impl.1} parent=0 // pred_check
    _
  $region7: #{_loss_forward_impl.1} parent=0 // pred_check_branch
    %617 = sbr.rel (0) target = $region9
  $region8: #{_loss_forward_impl.1} parent=0 // pred_region
    _
  $region9: #{_loss_forward_impl.1} parent=0 // pred_fallthru
    _
  // Predicated region
  $region10: #{_loss_forward_impl.1} parent=0 // pred_check
    _
  $region11: #{_loss_forward_impl.1} parent=0 // pred_check_branch
    %619 = sbr.rel (0) target = $region13
  $region12: #{_loss_forward_impl.1} parent=0 // pred_region
    _
  $region13: #{_loss_forward_impl.1} parent=0 // pred_fallthru
    _

</llo_original>
